<compile_context>
chip_gen: v7x
topology: tpu7x:2x2x1
jax: 0.10.0
libtpu: 0.0.40
codegen_flags: <defaults>
</compile_context>

<pallas_src>
import math
import jax
import jax.numpy as jnp
from jax import lax
from jax.experimental import pallas as pl
from jax.experimental.pallas import tpu as pltpu

EPS = float(jnp.finfo(jnp.float32).eps)
LOSS_VAR_COF = True  # stands in for hparams.MODEL.IND_TRANSFORMER.LOSS_VAR_COF
_LANE = 128


# ---------------------------------------------------------------------------
# glue: transform_maps (external to the provided module)
# ---------------------------------------------------------------------------
def transform_maps(x, scale, rotate, translation_factor):
    # TODO(synk): `transform_maps` is defined outside the provided module; we
    # implement a standard inverse-affine bilinear warp (grid_sample-style)
    # consistent with its call signature. Gather-heavy -> kept in plain JAX.
    B, C, H, W = x.shape
    ys = (jnp.arange(H, dtype=jnp.float32) + 0.5) / H * 2.0 - 1.0
    xs = (jnp.arange(W, dtype=jnp.float32) + 0.5) / W * 2.0 - 1.0
    gy, gx = jnp.meshgrid(ys, xs, indexing="ij")  # [H, W]
    cr = jnp.cos(rotate)[:, None, None]
    sr = jnp.sin(rotate)[:, None, None]
    inv_s = (1.0 / scale)[:, None, None]
    u = gx[None] - translation_factor[:, 0][:, None, None]
    v = gy[None] - translation_factor[:, 1][:, None, None]
    sx = inv_s * (cr * u + sr * v)
    sy = inv_s * (-sr * u + cr * v)
    px = (sx + 1.0) * 0.5 * W - 0.5
    py = (sy + 1.0) * 0.5 * H - 0.5
    x0 = jnp.floor(px)
    y0 = jnp.floor(py)
    wx = px - x0
    wy = py - y0
    x0i = jnp.clip(x0.astype(jnp.int32), 0, W - 1)
    x1i = jnp.clip(x0i + 1, 0, W - 1)
    y0i = jnp.clip(y0.astype(jnp.int32), 0, H - 1)
    y1i = jnp.clip(y0i + 1, 0, H - 1)

    def warp_one(img, y0_, y1_, x0_, x1_, wx_, wy_):
        # img: [C, H, W]
        v00 = img[:, y0_, x0_]
        v01 = img[:, y0_, x1_]
        v10 = img[:, y1_, x0_]
        v11 = img[:, y1_, x1_]
        wxb = wx_[None]
        wyb = wy_[None]
        top = v00 * (1.0 - wxb) + v01 * wxb
        bot = v10 * (1.0 - wxb) + v11 * wxb
        return top * (1.0 - wyb) + bot * wyb

    return jax.vmap(warp_one)(x, y0i, y1i, x0i, x1i, wx, wy)


# ---------------------------------------------------------------------------
# in-kernel acos (cephes-style, sqrt + polynomial only -> guaranteed to lower)
# ---------------------------------------------------------------------------
def _acos(x):
    a = jnp.abs(x)
    big = a > 0.5
    z = jnp.where(big, 0.5 * (1.0 - a), x * x)
    s = jnp.where(big, jnp.sqrt(z), x)  # signed for the small branch
    p = ((((4.2163199048e-2 * z + 2.4181311049e-2) * z + 4.5470025998e-2) * z
          + 7.4953002686e-2) * z + 1.6666752422e-1)
    r = s + s * z * p  # asin(s), |s| <= ~0.707
    acos_small = (math.pi / 2.0) - r
    acos_big = jnp.where(x < 0.0, math.pi - 2.0 * r, 2.0 * r)
    return jnp.where(big, acos_big, acos_small)


# ---------------------------------------------------------------------------
# the Pallas kernel: one batch sample per grid step, emits 8 partial sums
# ---------------------------------------------------------------------------
def _loss_kernel(rot_ref,                               # SMEM (B, 3) f32
                 cot_ref, sot_ref, sct_ref,             # (1, S, 128) bf16
                 cos_t_ref, sin_t_ref, scl_t_ref,       # (1, S, 128) bf16
                 mask_max_ref,                          # (1, S, 128) bf16
                 cos_o_ref, sin_o_ref,                  # (1, S, 128) bf16
                 mask_sep_ref,                          # (1, Cs, S, 128) bf16
                 out_ref):                              # (1, 1, 128) f32
    f32 = jnp.float32
    b = pl.program_id(0)
    rc = rot_ref[b, 0]          # cos(rotate)
    rs = rot_ref[b, 1]          # sin(rotate)
    sc = rot_ref[b, 2]          # scale

    cot = cot_ref[0].astype(f32)        # warped cos_ori
    sot = sot_ref[0].astype(f32)        # warped sin_ori
    sct = sct_ref[0].astype(f32)        # warped scale_ori
    cos_tr = cos_t_ref[0].astype(f32)
    sin_tr = sin_t_ref[0].astype(f32)
    scl_tr = scl_t_ref[0].astype(f32)
    m = mask_max_ref[0].astype(f32)     # mask_trans[:, 0]

    # apply the in-plane rotation / scale to the warped orientation maps
    cos_ot = cot * rc - sot * rs
    sin_ot = cot * rs + sot * rc
    scl_ot = sct * sc
    inv_norm = pl.reciprocal(jnp.sqrt(cos_ot * cos_ot + sin_ot * sin_ot) + EPS,
                             approx=True)
    cos_ot = cos_ot * inv_norm
    sin_ot = sin_ot * inv_norm

    dot = cos_ot * cos_tr + sin_ot * sin_tr
    dc = 1.0 - dot                                          # dis_cossim
    da = _acos(jnp.clip(dot, -1.0 + EPS, 1.0 - EPS))        # dis_angle >= 0
    ds = jnp.log(scl_ot * pl.reciprocal(scl_tr + EPS, approx=True) + EPS)

    msum = jnp.sum(m)
    s_dc2 = jnp.sum(dc * dc * m)
    s_ds2 = jnp.sum(ds * ds * m)
    s_da = jnp.sum(da * m)              # acos output is >= 0: abs() dropped
    s_dsa = jnp.sum(jnp.abs(ds) * m)

    # ---- orientation-variance term over the separate mask channels ----
    cos_o = cos_o_ref[0].astype(f32)    # un-warped cos_ori
    sin_o = sin_o_ref[0].astype(f32)

    def chan_body(i, carry):
        vl, va, ms = carry
        mi = mask_sep_ref[0, i].astype(f32)                 # (S, 128)
        spa = jnp.sum(mi)
        inv_spa = 1.0 / (spa + EPS)
        ca = jnp.sum(cos_o * mi) * inv_spa
        sa = jnp.sum(sin_o * mi) * inv_spa
        inv_n = 1.0 / (jnp.sqrt(ca * ca + sa * sa) + EPS)
        ca = ca * inv_n
        sa = sa * inv_n
        diff = _acos(jnp.clip(cos_o * ca + sin_o * sa, -1.0 + EPS, 1.0 - EPS))
        valid = (spa > 0.0).astype(f32)   # per-sample validity gate
        vl = vl + valid * jnp.sum(diff * diff * mi)
        va = va + valid * jnp.sum(diff * mi)                # diff >= 0
        ms = ms + spa
        return vl, va, ms

    c_sep = mask_sep_ref.shape[1]
    zero = jnp.float32(0.0)
    vl, va, ms = lax.fori_loop(0, c_sep, chan_body, (zero, zero, zero),
                               unroll=True)

    # lane-dense partial-sum row: [msum, sum(dc^2 m), sum(ds^2 m), sum(da m),
    #                              sum(|ds| m), var_loss, var_avg, mask_sep_sum]
    lane = lax.broadcasted_iota(jnp.int32, (1, _LANE), 1)
    row = jnp.zeros((1, _LANE), f32)
    for k, v in enumerate((msum, s_dc2, s_ds2, s_da, s_dsa, vl, va, ms)):
        row = jnp.where(lane == k, v, row)
    out_ref[0] = row


# ---------------------------------------------------------------------------
# wrapper
# ---------------------------------------------------------------------------
def transformer_loss(ori, trans, scale, rotate, translation, mask, mask_trans):
    cos_ori, sin_ori, scale_ori = ori
    cos_trans, sin_trans, scale_trans = trans
    B, C, H, W = cos_ori.shape
    assert C == 1
    assert scale.ndim == 1 and rotate.ndim == 1 and translation.ndim == 2
    assert mask_trans.shape[1] > 1

    # glue: spatial warp of the original maps (gather-heavy -> plain JAX)
    cot = transform_maps(cos_ori, scale, rotate, translation)
    sot = transform_maps(sin_ori, scale, rotate, translation)
    sct = transform_maps(scale_ori, scale, rotate, translation)

    HW = H * W
    S = (HW + _LANE - 1) // _LANE
    pad = S * _LANE - HW
    Cs = mask.shape[1] - 1

    def prep_map(a):                 # (B,1,H,W) or (B,H,W) -> (B, S, 128) bf16
        a = a.reshape(B, HW).astype(jnp.bfloat16)
        if pad:
            a = jnp.pad(a, ((0, 0), (0, pad)))
        return a.reshape(B, S, _LANE)

    # no transpose: free reshape keeps HW lane-dense; kernel slices channel i
    mask_sep = mask[:, 1:].reshape(B, Cs, HW).astype(jnp.bfloat16)
    if pad:
        mask_sep = jnp.pad(mask_sep, ((0, 0), (0, 0), (0, pad)))
    mask_sep = mask_sep.reshape(B, Cs, S, _LANE)

    rot_scale = jnp.stack([jnp.cos(rotate), jnp.sin(rotate), scale],
                          axis=1).astype(jnp.float32)              # (B, 3)

    map_spec = pl.BlockSpec((1, S, _LANE), lambda b: (b, 0, 0))
    in_specs = ([pl.BlockSpec(memory_space=pltpu.MemorySpace.SMEM)]
                + [map_spec] * 9
                + [pl.BlockSpec((1, Cs, S, _LANE), lambda b: (b, 0, 0, 0))])
    out_specs = pl.BlockSpec((1, 1, _LANE), lambda b: (b, 0, 0))

    # size scoped VMEM from the chosen per-step tile (double-buffered bf16
    # inputs + f32 working-set headroom), clamped to be safe on v7x (64 MiB).
    bytes_per_step = (9 + Cs) * S * _LANE * 2
    vmem_limit = int(min(max(2 * bytes_per_step + 12 * S * _LANE * 4 + (2 << 20),
                             16 << 20), 48 << 20))

    partials = pl.pallas_call(
        _loss_kernel,
        out_shape=jax.ShapeDtypeStruct((B, 1, _LANE), jnp.float32),
        grid_spec=pltpu.PrefetchScalarGridSpec(
            num_scalar_prefetch=0, grid=(B,),
            in_specs=in_specs, out_specs=out_specs),
        compiler_params=pltpu.CompilerParams(
            dimension_semantics=("parallel",),
            vmem_limit_bytes=vmem_limit),
    )(rot_scale,
      prep_map(cot), prep_map(sot), prep_map(sct),
      prep_map(cos_trans), prep_map(sin_trans), prep_map(scale_trans),
      prep_map(mask_trans[:, 0]),
      prep_map(cos_ori), prep_map(sin_ori),
      mask_sep)

    # trivial scalar finalize (combine per-sample partials, divide, zero-guard)
    sums = jnp.sum(partials[:, 0, :8], axis=0)
    msum, s_dc2, s_ds2, s_da, s_dsa, s_vl, s_va, s_ms = [sums[k] for k in range(8)]

    zero = jnp.float32(0.0)
    pos = msum > 0.0
    angle_loss = jnp.where(pos, s_dc2 / msum, zero)
    scale_loss = jnp.where(pos, s_ds2 / msum, zero)
    angle_avg = jnp.where(pos, s_da / msum, zero)
    scale_avg = jnp.where(pos, s_dsa / msum, zero)

    if LOSS_VAR_COF:
        sep_pos = s_ms > 0.0
        var_loss = jnp.where(sep_pos, s_vl / s_ms, zero)
        var_avg = jnp.where(sep_pos, s_va / s_ms, zero)
    else:
        var_loss = zero
        var_avg = zero

    return (angle_loss, scale_loss, var_loss, angle_avg, scale_avg, var_avg)


if __name__ == "__main__":
    key = jax.random.PRNGKey(0)
    B, H, W, C_MASK = 2, 16, 16, 4
    ks = jax.random.split(key, 9)

    theta_ori = jax.random.uniform(ks[0], (B, 1, H, W), minval=-math.pi, maxval=math.pi)
    cos_ori = jnp.cos(theta_ori)
    sin_ori = jnp.sin(theta_ori)
    scale_ori = jax.random.uniform(ks[1], (B, 1, H, W), minval=0.5, maxval=2.0)

    theta_tr = jax.random.uniform(ks[2], (B, 1, H, W), minval=-math.pi, maxval=math.pi)
    cos_trans = jnp.cos(theta_tr)
    sin_trans = jnp.sin(theta_tr)
    scale_trans = jax.random.uniform(ks[3], (B, 1, H, W), minval=0.5, maxval=2.0)

    scale = jax.random.uniform(ks[4], (B,), minval=0.8, maxval=1.25)
    rotate = jax.random.uniform(ks[5], (B,), minval=-0.5, maxval=0.5)
    translation = jax.random.uniform(ks[6], (B, 2), minval=-0.2, maxval=0.2)

    mask = (jax.random.uniform(ks[7], (B, C_MASK, H, W)) > 0.5).astype(jnp.float32)
    mask_trans = (jax.random.uniform(ks[8], (B, C_MASK, H, W)) > 0.5).astype(jnp.float32)

    fn = jax.jit(transformer_loss)
    res = fn((cos_ori, sin_ori, scale_ori),
             (cos_trans, sin_trans, scale_trans),
             scale, rotate, translation, mask, mask_trans)
    res = jax.block_until_ready(res)
    print("KERNEL_OK")
</pallas_src>

<mosaic_0001>
module attributes {stable_mosaic.version = 11 : i64} {
  func.func @_loss_kernel(%arg0: i32, %arg1: memref<2x3xf32, #tpu.memory_space<smem>>, %arg2: memref<1x2x128xbf16, #tpu.memory_space<vmem>>, %arg3: memref<1x2x128xbf16, #tpu.memory_space<vmem>>, %arg4: memref<1x2x128xbf16, #tpu.memory_space<vmem>>, %arg5: memref<1x2x128xbf16, #tpu.memory_space<vmem>>, %arg6: memref<1x2x128xbf16, #tpu.memory_space<vmem>>, %arg7: memref<1x2x128xbf16, #tpu.memory_space<vmem>>, %arg8: memref<1x2x128xbf16, #tpu.memory_space<vmem>>, %arg9: memref<1x2x128xbf16, #tpu.memory_space<vmem>>, %arg10: memref<1x2x128xbf16, #tpu.memory_space<vmem>>, %arg11: memref<1x3x2x128xbf16, #tpu.memory_space<vmem>>, %arg12: memref<1x1x128xf32, #tpu.memory_space<vmem>>) attributes {dimension_semantics = [#tpu.dimension_semantics<parallel>], iteration_bounds = array<i64: 2>, scalar_prefetch = 0 : i64, scratch_operands = 0 : i64, tpu.core_type = #tpu.core_type<tc>, window_params = [{transform_indices = @transform_0, window_bounds = array<i64: 2, 3>}, {transform_indices = @transform_1, window_bounds = array<i64: 1, 2, 128>}, {transform_indices = @transform_2, window_bounds = array<i64: 1, 2, 128>}, {transform_indices = @transform_3, window_bounds = array<i64: 1, 2, 128>}, {transform_indices = @transform_4, window_bounds = array<i64: 1, 2, 128>}, {transform_indices = @transform_5, window_bounds = array<i64: 1, 2, 128>}, {transform_indices = @transform_6, window_bounds = array<i64: 1, 2, 128>}, {transform_indices = @transform_7, window_bounds = array<i64: 1, 2, 128>}, {transform_indices = @transform_8, window_bounds = array<i64: 1, 2, 128>}, {transform_indices = @transform_9, window_bounds = array<i64: 1, 2, 128>}, {transform_indices = @transform_10, window_bounds = array<i64: 1, 3, 2, 128>}, {transform_indices = @transform_11, window_bounds = array<i64: 1, 1, 128>}]} {
    %0 = arith.index_cast %arg0 : i32 to index
    %c0 = arith.constant 0 : index
    %1 = memref.load %arg1[%0, %c0] : memref<2x3xf32, #tpu.memory_space<smem>>
    %2 = arith.index_cast %arg0 : i32 to index
    %c1 = arith.constant 1 : index
    %3 = memref.load %arg1[%2, %c1] : memref<2x3xf32, #tpu.memory_space<smem>>
    %4 = arith.index_cast %arg0 : i32 to index
    %c2 = arith.constant 2 : index
    %5 = memref.load %arg1[%4, %c2] : memref<2x3xf32, #tpu.memory_space<smem>>
    %c0_0 = arith.constant 0 : index
    %c0_1 = arith.constant 0 : index
    %c0_2 = arith.constant 0 : index
    %6 = vector.load %arg2[%c0_0, %c0_1, %c0_2] : memref<1x2x128xbf16, #tpu.memory_space<vmem>>, vector<1x2x128xbf16>
    %7 = vector.shape_cast %6 : vector<1x2x128xbf16> to vector<2x128xbf16>
    %8 = arith.extf %7 : vector<2x128xbf16> to vector<2x128xf32>
    %c0_3 = arith.constant 0 : index
    %c0_4 = arith.constant 0 : index
    %c0_5 = arith.constant 0 : index
    %9 = vector.load %arg3[%c0_3, %c0_4, %c0_5] : memref<1x2x128xbf16, #tpu.memory_space<vmem>>, vector<1x2x128xbf16>
    %10 = vector.shape_cast %9 : vector<1x2x128xbf16> to vector<2x128xbf16>
    %11 = arith.extf %10 : vector<2x128xbf16> to vector<2x128xf32>
    %c0_6 = arith.constant 0 : index
    %c0_7 = arith.constant 0 : index
    %c0_8 = arith.constant 0 : index
    %12 = vector.load %arg4[%c0_6, %c0_7, %c0_8] : memref<1x2x128xbf16, #tpu.memory_space<vmem>>, vector<1x2x128xbf16>
    %13 = vector.shape_cast %12 : vector<1x2x128xbf16> to vector<2x128xbf16>
    %14 = arith.extf %13 : vector<2x128xbf16> to vector<2x128xf32>
    %c0_9 = arith.constant 0 : index
    %c0_10 = arith.constant 0 : index
    %c0_11 = arith.constant 0 : index
    %15 = vector.load %arg5[%c0_9, %c0_10, %c0_11] : memref<1x2x128xbf16, #tpu.memory_space<vmem>>, vector<1x2x128xbf16>
    %16 = vector.shape_cast %15 : vector<1x2x128xbf16> to vector<2x128xbf16>
    %17 = arith.extf %16 : vector<2x128xbf16> to vector<2x128xf32>
    %c0_12 = arith.constant 0 : index
    %c0_13 = arith.constant 0 : index
    %c0_14 = arith.constant 0 : index
    %18 = vector.load %arg6[%c0_12, %c0_13, %c0_14] : memref<1x2x128xbf16, #tpu.memory_space<vmem>>, vector<1x2x128xbf16>
    %19 = vector.shape_cast %18 : vector<1x2x128xbf16> to vector<2x128xbf16>
    %20 = arith.extf %19 : vector<2x128xbf16> to vector<2x128xf32>
    %c0_15 = arith.constant 0 : index
    %c0_16 = arith.constant 0 : index
    %c0_17 = arith.constant 0 : index
    %21 = vector.load %arg7[%c0_15, %c0_16, %c0_17] : memref<1x2x128xbf16, #tpu.memory_space<vmem>>, vector<1x2x128xbf16>
    %22 = vector.shape_cast %21 : vector<1x2x128xbf16> to vector<2x128xbf16>
    %23 = arith.extf %22 : vector<2x128xbf16> to vector<2x128xf32>
    %c0_18 = arith.constant 0 : index
    %c0_19 = arith.constant 0 : index
    %c0_20 = arith.constant 0 : index
    %24 = vector.load %arg8[%c0_18, %c0_19, %c0_20] : memref<1x2x128xbf16, #tpu.memory_space<vmem>>, vector<1x2x128xbf16>
    %25 = vector.shape_cast %24 : vector<1x2x128xbf16> to vector<2x128xbf16>
    %26 = arith.extf %25 : vector<2x128xbf16> to vector<2x128xf32>
    %27 = vector.broadcast %1 : f32 to vector<2x128xf32>
    %28 = arith.mulf %8, %27 : vector<2x128xf32>
    %29 = vector.broadcast %3 : f32 to vector<2x128xf32>
    %30 = arith.mulf %11, %29 : vector<2x128xf32>
    %31 = arith.subf %28, %30 : vector<2x128xf32>
    %32 = vector.broadcast %3 : f32 to vector<2x128xf32>
    %33 = arith.mulf %8, %32 : vector<2x128xf32>
    %34 = vector.broadcast %1 : f32 to vector<2x128xf32>
    %35 = arith.mulf %11, %34 : vector<2x128xf32>
    %36 = arith.addf %33, %35 : vector<2x128xf32>
    %37 = vector.broadcast %5 : f32 to vector<2x128xf32>
    %38 = arith.mulf %14, %37 : vector<2x128xf32>
    %39 = arith.mulf %31, %31 : vector<2x128xf32>
    %40 = arith.mulf %36, %36 : vector<2x128xf32>
    %41 = arith.addf %39, %40 : vector<2x128xf32>
    %42 = math.sqrt %41 : vector<2x128xf32>
    %cst = arith.constant 1.1920929E-7 : f32
    %43 = vector.broadcast %cst : f32 to vector<2x128xf32>
    %44 = arith.addf %42, %43 : vector<2x128xf32>
    %45 = tpu.reciprocal %44 {approx = true} : vector<2x128xf32> -> vector<2x128xf32>
    %46 = arith.mulf %31, %45 : vector<2x128xf32>
    %47 = arith.mulf %36, %45 : vector<2x128xf32>
    %48 = arith.mulf %46, %17 : vector<2x128xf32>
    %49 = arith.mulf %47, %20 : vector<2x128xf32>
    %50 = arith.addf %48, %49 : vector<2x128xf32>
    %cst_21 = arith.constant 1.000000e+00 : f32
    %51 = vector.broadcast %cst_21 : f32 to vector<2x128xf32>
    %52 = arith.subf %51, %50 : vector<2x128xf32>
    %cst_22 = arith.constant -0.99999988 : f32
    %cst_23 = arith.constant 0.99999988 : f32
    %53 = vector.broadcast %cst_22 : f32 to vector<2x128xf32>
    %54 = arith.maximumf %53, %50 : vector<2x128xf32>
    %55 = vector.broadcast %cst_23 : f32 to vector<2x128xf32>
    %56 = arith.minimumf %55, %54 : vector<2x128xf32>
    %57 = math.absf %56 : vector<2x128xf32>
    %cst_24 = arith.constant 5.000000e-01 : f32
    %58 = vector.broadcast %cst_24 : f32 to vector<2x128xf32>
    %59 = arith.cmpf ogt, %57, %58 : vector<2x128xf32>
    %cst_25 = arith.constant 1.000000e+00 : f32
    %60 = vector.broadcast %cst_25 : f32 to vector<2x128xf32>
    %61 = arith.subf %60, %57 : vector<2x128xf32>
    %cst_26 = arith.constant 5.000000e-01 : f32
    %62 = vector.broadcast %cst_26 : f32 to vector<2x128xf32>
    %63 = arith.mulf %62, %61 : vector<2x128xf32>
    %64 = arith.mulf %56, %56 : vector<2x128xf32>
    %65 = arith.select %59, %63, %64 : vector<2x128xi1>, vector<2x128xf32>
    %66 = math.sqrt %65 : vector<2x128xf32>
    %67 = arith.select %59, %66, %56 : vector<2x128xi1>, vector<2x128xf32>
    %cst_27 = arith.constant 4.216320e-02 : f32
    %68 = vector.broadcast %cst_27 : f32 to vector<2x128xf32>
    %69 = arith.mulf %68, %65 : vector<2x128xf32>
    %cst_28 = arith.constant 0.024181312 : f32
    %70 = vector.broadcast %cst_28 : f32 to vector<2x128xf32>
    %71 = arith.addf %69, %70 : vector<2x128xf32>
    %72 = arith.mulf %71, %65 : vector<2x128xf32>
    %cst_29 = arith.constant 0.0454700254 : f32
    %73 = vector.broadcast %cst_29 : f32 to vector<2x128xf32>
    %74 = arith.addf %72, %73 : vector<2x128xf32>
    %75 = arith.mulf %74, %65 : vector<2x128xf32>
    %cst_30 = arith.constant 0.0749530047 : f32
    %76 = vector.broadcast %cst_30 : f32 to vector<2x128xf32>
    %77 = arith.addf %75, %76 : vector<2x128xf32>
    %78 = arith.mulf %77, %65 : vector<2x128xf32>
    %cst_31 = arith.constant 0.166667521 : f32
    %79 = vector.broadcast %cst_31 : f32 to vector<2x128xf32>
    %80 = arith.addf %78, %79 : vector<2x128xf32>
    %81 = arith.mulf %67, %65 : vector<2x128xf32>
    %82 = arith.mulf %81, %80 : vector<2x128xf32>
    %83 = arith.addf %67, %82 : vector<2x128xf32>
    %cst_32 = arith.constant 1.57079637 : f32
    %84 = vector.broadcast %cst_32 : f32 to vector<2x128xf32>
    %85 = arith.subf %84, %83 : vector<2x128xf32>
    %cst_33 = arith.constant 0.000000e+00 : f32
    %86 = vector.broadcast %cst_33 : f32 to vector<2x128xf32>
    %87 = arith.cmpf olt, %56, %86 : vector<2x128xf32>
    %cst_34 = arith.constant 2.000000e+00 : f32
    %88 = vector.broadcast %cst_34 : f32 to vector<2x128xf32>
    %89 = arith.mulf %88, %83 : vector<2x128xf32>
    %cst_35 = arith.constant 3.14159274 : f32
    %90 = vector.broadcast %cst_35 : f32 to vector<2x128xf32>
    %91 = arith.subf %90, %89 : vector<2x128xf32>
    %cst_36 = arith.constant 2.000000e+00 : f32
    %92 = vector.broadcast %cst_36 : f32 to vector<2x128xf32>
    %93 = arith.mulf %92, %83 : vector<2x128xf32>
    %94 = arith.select %87, %91, %93 : vector<2x128xi1>, vector<2x128xf32>
    %95 = arith.select %59, %94, %85 : vector<2x128xi1>, vector<2x128xf32>
    %cst_37 = arith.constant 1.1920929E-7 : f32
    %96 = vector.broadcast %cst_37 : f32 to vector<2x128xf32>
    %97 = arith.addf %23, %96 : vector<2x128xf32>
    %98 = tpu.reciprocal %97 {approx = true} : vector<2x128xf32> -> vector<2x128xf32>
    %99 = arith.mulf %38, %98 : vector<2x128xf32>
    %cst_38 = arith.constant 1.1920929E-7 : f32
    %100 = vector.broadcast %cst_38 : f32 to vector<2x128xf32>
    %101 = arith.addf %99, %100 : vector<2x128xf32>
    %102 = math.log %101 : vector<2x128xf32>
    %103 = vector.shape_cast %26 : vector<2x128xf32> to vector<1x2x128xf32>
    %cst_39 = arith.constant dense<0.000000e+00> : vector<1xf32>
    %104 = vector.multi_reduction <add>, %103, %cst_39 [1, 2] : vector<1x2x128xf32> to vector<1xf32>
    %105 = vector.shape_cast %104 : vector<1xf32> to vector<1x1x1xf32>
    %106 = vector.extract %105[0, 0, 0] : f32 from vector<1x1x1xf32>
    %107 = arith.mulf %52, %52 : vector<2x128xf32>
    %108 = arith.mulf %107, %26 : vector<2x128xf32>
    %109 = vector.shape_cast %108 : vector<2x128xf32> to vector<1x2x128xf32>
    %cst_40 = arith.constant dense<0.000000e+00> : vector<1xf32>
    %110 = vector.multi_reduction <add>, %109, %cst_40 [1, 2] : vector<1x2x128xf32> to vector<1xf32>
    %111 = vector.shape_cast %110 : vector<1xf32> to vector<1x1x1xf32>
    %112 = vector.extract %111[0, 0, 0] : f32 from vector<1x1x1xf32>
    %113 = arith.mulf %102, %102 : vector<2x128xf32>
    %114 = arith.mulf %113, %26 : vector<2x128xf32>
    %115 = vector.shape_cast %114 : vector<2x128xf32> to vector<1x2x128xf32>
    %cst_41 = arith.constant dense<0.000000e+00> : vector<1xf32>
    %116 = vector.multi_reduction <add>, %115, %cst_41 [1, 2] : vector<1x2x128xf32> to vector<1xf32>
    %117 = vector.shape_cast %116 : vector<1xf32> to vector<1x1x1xf32>
    %118 = vector.extract %117[0, 0, 0] : f32 from vector<1x1x1xf32>
    %119 = arith.mulf %95, %26 : vector<2x128xf32>
    %120 = vector.shape_cast %119 : vector<2x128xf32> to vector<1x2x128xf32>
    %cst_42 = arith.constant dense<0.000000e+00> : vector<1xf32>
    %121 = vector.multi_reduction <add>, %120, %cst_42 [1, 2] : vector<1x2x128xf32> to vector<1xf32>
    %122 = vector.shape_cast %121 : vector<1xf32> to vector<1x1x1xf32>
    %123 = vector.extract %122[0, 0, 0] : f32 from vector<1x1x1xf32>
    %124 = math.absf %102 : vector<2x128xf32>
    %125 = arith.mulf %124, %26 : vector<2x128xf32>
    %126 = vector.shape_cast %125 : vector<2x128xf32> to vector<1x2x128xf32>
    %cst_43 = arith.constant dense<0.000000e+00> : vector<1xf32>
    %127 = vector.multi_reduction <add>, %126, %cst_43 [1, 2] : vector<1x2x128xf32> to vector<1xf32>
    %128 = vector.shape_cast %127 : vector<1xf32> to vector<1x1x1xf32>
    %129 = vector.extract %128[0, 0, 0] : f32 from vector<1x1x1xf32>
    %c0_44 = arith.constant 0 : index
    %c0_45 = arith.constant 0 : index
    %c0_46 = arith.constant 0 : index
    %130 = vector.load %arg9[%c0_44, %c0_45, %c0_46] : memref<1x2x128xbf16, #tpu.memory_space<vmem>>, vector<1x2x128xbf16>
    %131 = vector.shape_cast %130 : vector<1x2x128xbf16> to vector<2x128xbf16>
    %132 = arith.extf %131 : vector<2x128xbf16> to vector<2x128xf32>
    %c0_47 = arith.constant 0 : index
    %c0_48 = arith.constant 0 : index
    %c0_49 = arith.constant 0 : index
    %133 = vector.load %arg10[%c0_47, %c0_48, %c0_49] : memref<1x2x128xbf16, #tpu.memory_space<vmem>>, vector<1x2x128xbf16>
    %134 = vector.shape_cast %133 : vector<1x2x128xbf16> to vector<2x128xbf16>
    %135 = arith.extf %134 : vector<2x128xbf16> to vector<2x128xf32>
    %cst_50 = arith.constant 0.000000e+00 : f32
    %cst_51 = arith.constant 0.000000e+00 : f32
    %cst_52 = arith.constant 0.000000e+00 : f32
    %c0_i32 = arith.constant 0 : i32
    %c0_53 = arith.constant 0 : index
    %136 = arith.index_cast %c0_i32 : i32 to index
    %c0_54 = arith.constant 0 : index
    %c0_55 = arith.constant 0 : index
    %137 = vector.load %arg11[%c0_53, %136, %c0_54, %c0_55] : memref<1x3x2x128xbf16, #tpu.memory_space<vmem>>, vector<1x1x2x128xbf16>
    %138 = vector.shape_cast %137 : vector<1x1x2x128xbf16> to vector<2x128xbf16>
    %139 = arith.extf %138 : vector<2x128xbf16> to vector<2x128xf32>
    %140 = vector.shape_cast %139 : vector<2x128xf32> to vector<1x2x128xf32>
    %cst_56 = arith.constant dense<0.000000e+00> : vector<1xf32>
    %141 = vector.multi_reduction <add>, %140, %cst_56 [1, 2] : vector<1x2x128xf32> to vector<1xf32>
    %142 = vector.shape_cast %141 : vector<1xf32> to vector<1x1x1xf32>
    %143 = vector.extract %142[0, 0, 0] : f32 from vector<1x1x1xf32>
    %cst_57 = arith.constant 1.1920929E-7 : f32
    %144 = arith.addf %143, %cst_57 : f32
    %cst_58 = arith.constant 1.000000e+00 : f32
    %145 = arith.divf %cst_58, %144 : f32
    %146 = arith.mulf %132, %139 : vector<2x128xf32>
    %147 = vector.shape_cast %146 : vector<2x128xf32> to vector<1x2x128xf32>
    %cst_59 = arith.constant dense<0.000000e+00> : vector<1xf32>
    %148 = vector.multi_reduction <add>, %147, %cst_59 [1, 2] : vector<1x2x128xf32> to vector<1xf32>
    %149 = vector.shape_cast %148 : vector<1xf32> to vector<1x1x1xf32>
    %150 = vector.extract %149[0, 0, 0] : f32 from vector<1x1x1xf32>
    %151 = arith.mulf %150, %145 : f32
    %152 = arith.mulf %135, %139 : vector<2x128xf32>
    %153 = vector.shape_cast %152 : vector<2x128xf32> to vector<1x2x128xf32>
    %cst_60 = arith.constant dense<0.000000e+00> : vector<1xf32>
    %154 = vector.multi_reduction <add>, %153, %cst_60 [1, 2] : vector<1x2x128xf32> to vector<1xf32>
    %155 = vector.shape_cast %154 : vector<1xf32> to vector<1x1x1xf32>
    %156 = vector.extract %155[0, 0, 0] : f32 from vector<1x1x1xf32>
    %157 = arith.mulf %156, %145 : f32
    %158 = arith.mulf %151, %151 : f32
    %159 = arith.mulf %157, %157 : f32
    %160 = arith.addf %158, %159 : f32
    %161 = math.sqrt %160 : f32
    %cst_61 = arith.constant 1.1920929E-7 : f32
    %162 = arith.addf %161, %cst_61 : f32
    %cst_62 = arith.constant 1.000000e+00 : f32
    %163 = arith.divf %cst_62, %162 : f32
    %164 = arith.mulf %151, %163 : f32
    %165 = arith.mulf %157, %163 : f32
    %166 = vector.broadcast %164 : f32 to vector<2x128xf32>
    %167 = arith.mulf %132, %166 : vector<2x128xf32>
    %168 = vector.broadcast %165 : f32 to vector<2x128xf32>
    %169 = arith.mulf %135, %168 : vector<2x128xf32>
    %170 = arith.addf %167, %169 : vector<2x128xf32>
    %cst_63 = arith.constant -0.99999988 : f32
    %cst_64 = arith.constant 0.99999988 : f32
    %171 = vector.broadcast %cst_63 : f32 to vector<2x128xf32>
    %172 = arith.maximumf %171, %170 : vector<2x128xf32>
    %173 = vector.broadcast %cst_64 : f32 to vector<2x128xf32>
    %174 = arith.minimumf %173, %172 : vector<2x128xf32>
    %175 = math.absf %174 : vector<2x128xf32>
    %cst_65 = arith.constant 5.000000e-01 : f32
    %176 = vector.broadcast %cst_65 : f32 to vector<2x128xf32>
    %177 = arith.cmpf ogt, %175, %176 : vector<2x128xf32>
    %cst_66 = arith.constant 1.000000e+00 : f32
    %178 = vector.broadcast %cst_66 : f32 to vector<2x128xf32>
    %179 = arith.subf %178, %175 : vector<2x128xf32>
    %cst_67 = arith.constant 5.000000e-01 : f32
    %180 = vector.broadcast %cst_67 : f32 to vector<2x128xf32>
    %181 = arith.mulf %180, %179 : vector<2x128xf32>
    %182 = arith.mulf %174, %174 : vector<2x128xf32>
    %183 = arith.select %177, %181, %182 : vector<2x128xi1>, vector<2x128xf32>
    %184 = math.sqrt %183 : vector<2x128xf32>
    %185 = arith.select %177, %184, %174 : vector<2x128xi1>, vector<2x128xf32>
    %cst_68 = arith.constant 4.216320e-02 : f32
    %186 = vector.broadcast %cst_68 : f32 to vector<2x128xf32>
    %187 = arith.mulf %186, %183 : vector<2x128xf32>
    %cst_69 = arith.constant 0.024181312 : f32
    %188 = vector.broadcast %cst_69 : f32 to vector<2x128xf32>
    %189 = arith.addf %187, %188 : vector<2x128xf32>
    %190 = arith.mulf %189, %183 : vector<2x128xf32>
    %cst_70 = arith.constant 0.0454700254 : f32
    %191 = vector.broadcast %cst_70 : f32 to vector<2x128xf32>
    %192 = arith.addf %190, %191 : vector<2x128xf32>
    %193 = arith.mulf %192, %183 : vector<2x128xf32>
    %cst_71 = arith.constant 0.0749530047 : f32
    %194 = vector.broadcast %cst_71 : f32 to vector<2x128xf32>
    %195 = arith.addf %193, %194 : vector<2x128xf32>
    %196 = arith.mulf %195, %183 : vector<2x128xf32>
    %cst_72 = arith.constant 0.166667521 : f32
    %197 = vector.broadcast %cst_72 : f32 to vector<2x128xf32>
    %198 = arith.addf %196, %197 : vector<2x128xf32>
    %199 = arith.mulf %185, %183 : vector<2x128xf32>
    %200 = arith.mulf %199, %198 : vector<2x128xf32>
    %201 = arith.addf %185, %200 : vector<2x128xf32>
    %cst_73 = arith.constant 1.57079637 : f32
    %202 = vector.broadcast %cst_73 : f32 to vector<2x128xf32>
    %203 = arith.subf %202, %201 : vector<2x128xf32>
    %cst_74 = arith.constant 0.000000e+00 : f32
    %204 = vector.broadcast %cst_74 : f32 to vector<2x128xf32>
    %205 = arith.cmpf olt, %174, %204 : vector<2x128xf32>
    %cst_75 = arith.constant 2.000000e+00 : f32
    %206 = vector.broadcast %cst_75 : f32 to vector<2x128xf32>
    %207 = arith.mulf %206, %201 : vector<2x128xf32>
    %cst_76 = arith.constant 3.14159274 : f32
    %208 = vector.broadcast %cst_76 : f32 to vector<2x128xf32>
    %209 = arith.subf %208, %207 : vector<2x128xf32>
    %cst_77 = arith.constant 2.000000e+00 : f32
    %210 = vector.broadcast %cst_77 : f32 to vector<2x128xf32>
    %211 = arith.mulf %210, %201 : vector<2x128xf32>
    %212 = arith.select %205, %209, %211 : vector<2x128xi1>, vector<2x128xf32>
    %213 = arith.select %177, %212, %203 : vector<2x128xi1>, vector<2x128xf32>
    %cst_78 = arith.constant 0.000000e+00 : f32
    %214 = arith.cmpf ogt, %143, %cst_78 : f32
    %215 = arith.extui %214 : i1 to i32
    %216 = arith.sitofp %215 : i32 to f32
    %217 = arith.mulf %213, %213 : vector<2x128xf32>
    %218 = arith.mulf %217, %139 : vector<2x128xf32>
    %219 = vector.shape_cast %218 : vector<2x128xf32> to vector<1x2x128xf32>
    %cst_79 = arith.constant dense<0.000000e+00> : vector<1xf32>
    %220 = vector.multi_reduction <add>, %219, %cst_79 [1, 2] : vector<1x2x128xf32> to vector<1xf32>
    %221 = vector.shape_cast %220 : vector<1xf32> to vector<1x1x1xf32>
    %222 = vector.extract %221[0, 0, 0] : f32 from vector<1x1x1xf32>
    %223 = arith.mulf %216, %222 : f32
    %224 = arith.addf %cst_50, %223 : f32
    %225 = arith.mulf %213, %139 : vector<2x128xf32>
    %226 = vector.shape_cast %225 : vector<2x128xf32> to vector<1x2x128xf32>
    %cst_80 = arith.constant dense<0.000000e+00> : vector<1xf32>
    %227 = vector.multi_reduction <add>, %226, %cst_80 [1, 2] : vector<1x2x128xf32> to vector<1xf32>
    %228 = vector.shape_cast %227 : vector<1xf32> to vector<1x1x1xf32>
    %229 = vector.extract %228[0, 0, 0] : f32 from vector<1x1x1xf32>
    %230 = arith.mulf %216, %229 : f32
    %231 = arith.addf %cst_51, %230 : f32
    %232 = arith.addf %cst_52, %143 : f32
    %c1_i32 = arith.constant 1 : i32
    %c0_81 = arith.constant 0 : index
    %233 = arith.index_cast %c1_i32 : i32 to index
    %c0_82 = arith.constant 0 : index
    %c0_83 = arith.constant 0 : index
    %234 = vector.load %arg11[%c0_81, %233, %c0_82, %c0_83] : memref<1x3x2x128xbf16, #tpu.memory_space<vmem>>, vector<1x1x2x128xbf16>
    %235 = vector.shape_cast %234 : vector<1x1x2x128xbf16> to vector<2x128xbf16>
    %236 = arith.extf %235 : vector<2x128xbf16> to vector<2x128xf32>
    %237 = vector.shape_cast %236 : vector<2x128xf32> to vector<1x2x128xf32>
    %cst_84 = arith.constant dense<0.000000e+00> : vector<1xf32>
    %238 = vector.multi_reduction <add>, %237, %cst_84 [1, 2] : vector<1x2x128xf32> to vector<1xf32>
    %239 = vector.shape_cast %238 : vector<1xf32> to vector<1x1x1xf32>
    %240 = vector.extract %239[0, 0, 0] : f32 from vector<1x1x1xf32>
    %cst_85 = arith.constant 1.1920929E-7 : f32
    %241 = arith.addf %240, %cst_85 : f32
    %cst_86 = arith.constant 1.000000e+00 : f32
    %242 = arith.divf %cst_86, %241 : f32
    %243 = arith.mulf %132, %236 : vector<2x128xf32>
    %244 = vector.shape_cast %243 : vector<2x128xf32> to vector<1x2x128xf32>
    %cst_87 = arith.constant dense<0.000000e+00> : vector<1xf32>
    %245 = vector.multi_reduction <add>, %244, %cst_87 [1, 2] : vector<1x2x128xf32> to vector<1xf32>
    %246 = vector.shape_cast %245 : vector<1xf32> to vector<1x1x1xf32>
    %247 = vector.extract %246[0, 0, 0] : f32 from vector<1x1x1xf32>
    %248 = arith.mulf %247, %242 : f32
    %249 = arith.mulf %135, %236 : vector<2x128xf32>
    %250 = vector.shape_cast %249 : vector<2x128xf32> to vector<1x2x128xf32>
    %cst_88 = arith.constant dense<0.000000e+00> : vector<1xf32>
    %251 = vector.multi_reduction <add>, %250, %cst_88 [1, 2] : vector<1x2x128xf32> to vector<1xf32>
    %252 = vector.shape_cast %251 : vector<1xf32> to vector<1x1x1xf32>
    %253 = vector.extract %252[0, 0, 0] : f32 from vector<1x1x1xf32>
    %254 = arith.mulf %253, %242 : f32
    %255 = arith.mulf %248, %248 : f32
    %256 = arith.mulf %254, %254 : f32
    %257 = arith.addf %255, %256 : f32
    %258 = math.sqrt %257 : f32
    %cst_89 = arith.constant 1.1920929E-7 : f32
    %259 = arith.addf %258, %cst_89 : f32
    %cst_90 = arith.constant 1.000000e+00 : f32
    %260 = arith.divf %cst_90, %259 : f32
    %261 = arith.mulf %248, %260 : f32
    %262 = arith.mulf %254, %260 : f32
    %263 = vector.broadcast %261 : f32 to vector<2x128xf32>
    %264 = arith.mulf %132, %263 : vector<2x128xf32>
    %265 = vector.broadcast %262 : f32 to vector<2x128xf32>
    %266 = arith.mulf %135, %265 : vector<2x128xf32>
    %267 = arith.addf %264, %266 : vector<2x128xf32>
    %cst_91 = arith.constant -0.99999988 : f32
    %cst_92 = arith.constant 0.99999988 : f32
    %268 = vector.broadcast %cst_91 : f32 to vector<2x128xf32>
    %269 = arith.maximumf %268, %267 : vector<2x128xf32>
    %270 = vector.broadcast %cst_92 : f32 to vector<2x128xf32>
    %271 = arith.minimumf %270, %269 : vector<2x128xf32>
    %272 = math.absf %271 : vector<2x128xf32>
    %cst_93 = arith.constant 5.000000e-01 : f32
    %273 = vector.broadcast %cst_93 : f32 to vector<2x128xf32>
    %274 = arith.cmpf ogt, %272, %273 : vector<2x128xf32>
    %cst_94 = arith.constant 1.000000e+00 : f32
    %275 = vector.broadcast %cst_94 : f32 to vector<2x128xf32>
    %276 = arith.subf %275, %272 : vector<2x128xf32>
    %cst_95 = arith.constant 5.000000e-01 : f32
    %277 = vector.broadcast %cst_95 : f32 to vector<2x128xf32>
    %278 = arith.mulf %277, %276 : vector<2x128xf32>
    %279 = arith.mulf %271, %271 : vector<2x128xf32>
    %280 = arith.select %274, %278, %279 : vector<2x128xi1>, vector<2x128xf32>
    %281 = math.sqrt %280 : vector<2x128xf32>
    %282 = arith.select %274, %281, %271 : vector<2x128xi1>, vector<2x128xf32>
    %cst_96 = arith.constant 4.216320e-02 : f32
    %283 = vector.broadcast %cst_96 : f32 to vector<2x128xf32>
    %284 = arith.mulf %283, %280 : vector<2x128xf32>
    %cst_97 = arith.constant 0.024181312 : f32
    %285 = vector.broadcast %cst_97 : f32 to vector<2x128xf32>
    %286 = arith.addf %284, %285 : vector<2x128xf32>
    %287 = arith.mulf %286, %280 : vector<2x128xf32>
    %cst_98 = arith.constant 0.0454700254 : f32
    %288 = vector.broadcast %cst_98 : f32 to vector<2x128xf32>
    %289 = arith.addf %287, %288 : vector<2x128xf32>
    %290 = arith.mulf %289, %280 : vector<2x128xf32>
    %cst_99 = arith.constant 0.0749530047 : f32
    %291 = vector.broadcast %cst_99 : f32 to vector<2x128xf32>
    %292 = arith.addf %290, %291 : vector<2x128xf32>
    %293 = arith.mulf %292, %280 : vector<2x128xf32>
    %cst_100 = arith.constant 0.166667521 : f32
    %294 = vector.broadcast %cst_100 : f32 to vector<2x128xf32>
    %295 = arith.addf %293, %294 : vector<2x128xf32>
    %296 = arith.mulf %282, %280 : vector<2x128xf32>
    %297 = arith.mulf %296, %295 : vector<2x128xf32>
    %298 = arith.addf %282, %297 : vector<2x128xf32>
    %cst_101 = arith.constant 1.57079637 : f32
    %299 = vector.broadcast %cst_101 : f32 to vector<2x128xf32>
    %300 = arith.subf %299, %298 : vector<2x128xf32>
    %cst_102 = arith.constant 0.000000e+00 : f32
    %301 = vector.broadcast %cst_102 : f32 to vector<2x128xf32>
    %302 = arith.cmpf olt, %271, %301 : vector<2x128xf32>
    %cst_103 = arith.constant 2.000000e+00 : f32
    %303 = vector.broadcast %cst_103 : f32 to vector<2x128xf32>
    %304 = arith.mulf %303, %298 : vector<2x128xf32>
    %cst_104 = arith.constant 3.14159274 : f32
    %305 = vector.broadcast %cst_104 : f32 to vector<2x128xf32>
    %306 = arith.subf %305, %304 : vector<2x128xf32>
    %cst_105 = arith.constant 2.000000e+00 : f32
    %307 = vector.broadcast %cst_105 : f32 to vector<2x128xf32>
    %308 = arith.mulf %307, %298 : vector<2x128xf32>
    %309 = arith.select %302, %306, %308 : vector<2x128xi1>, vector<2x128xf32>
    %310 = arith.select %274, %309, %300 : vector<2x128xi1>, vector<2x128xf32>
    %cst_106 = arith.constant 0.000000e+00 : f32
    %311 = arith.cmpf ogt, %240, %cst_106 : f32
    %312 = arith.extui %311 : i1 to i32
    %313 = arith.sitofp %312 : i32 to f32
    %314 = arith.mulf %310, %310 : vector<2x128xf32>
    %315 = arith.mulf %314, %236 : vector<2x128xf32>
    %316 = vector.shape_cast %315 : vector<2x128xf32> to vector<1x2x128xf32>
    %cst_107 = arith.constant dense<0.000000e+00> : vector<1xf32>
    %317 = vector.multi_reduction <add>, %316, %cst_107 [1, 2] : vector<1x2x128xf32> to vector<1xf32>
    %318 = vector.shape_cast %317 : vector<1xf32> to vector<1x1x1xf32>
    %319 = vector.extract %318[0, 0, 0] : f32 from vector<1x1x1xf32>
    %320 = arith.mulf %313, %319 : f32
    %321 = arith.addf %224, %320 : f32
    %322 = arith.mulf %310, %236 : vector<2x128xf32>
    %323 = vector.shape_cast %322 : vector<2x128xf32> to vector<1x2x128xf32>
    %cst_108 = arith.constant dense<0.000000e+00> : vector<1xf32>
    %324 = vector.multi_reduction <add>, %323, %cst_108 [1, 2] : vector<1x2x128xf32> to vector<1xf32>
    %325 = vector.shape_cast %324 : vector<1xf32> to vector<1x1x1xf32>
    %326 = vector.extract %325[0, 0, 0] : f32 from vector<1x1x1xf32>
    %327 = arith.mulf %313, %326 : f32
    %328 = arith.addf %231, %327 : f32
    %329 = arith.addf %232, %240 : f32
    %c2_i32 = arith.constant 2 : i32
    %c0_109 = arith.constant 0 : index
    %330 = arith.index_cast %c2_i32 : i32 to index
    %c0_110 = arith.constant 0 : index
    %c0_111 = arith.constant 0 : index
    %331 = vector.load %arg11[%c0_109, %330, %c0_110, %c0_111] : memref<1x3x2x128xbf16, #tpu.memory_space<vmem>>, vector<1x1x2x128xbf16>
    %332 = vector.shape_cast %331 : vector<1x1x2x128xbf16> to vector<2x128xbf16>
    %333 = arith.extf %332 : vector<2x128xbf16> to vector<2x128xf32>
    %334 = vector.shape_cast %333 : vector<2x128xf32> to vector<1x2x128xf32>
    %cst_112 = arith.constant dense<0.000000e+00> : vector<1xf32>
    %335 = vector.multi_reduction <add>, %334, %cst_112 [1, 2] : vector<1x2x128xf32> to vector<1xf32>
    %336 = vector.shape_cast %335 : vector<1xf32> to vector<1x1x1xf32>
    %337 = vector.extract %336[0, 0, 0] : f32 from vector<1x1x1xf32>
    %cst_113 = arith.constant 1.1920929E-7 : f32
    %338 = arith.addf %337, %cst_113 : f32
    %cst_114 = arith.constant 1.000000e+00 : f32
    %339 = arith.divf %cst_114, %338 : f32
    %340 = arith.mulf %132, %333 : vector<2x128xf32>
    %341 = vector.shape_cast %340 : vector<2x128xf32> to vector<1x2x128xf32>
    %cst_115 = arith.constant dense<0.000000e+00> : vector<1xf32>
    %342 = vector.multi_reduction <add>, %341, %cst_115 [1, 2] : vector<1x2x128xf32> to vector<1xf32>
    %343 = vector.shape_cast %342 : vector<1xf32> to vector<1x1x1xf32>
    %344 = vector.extract %343[0, 0, 0] : f32 from vector<1x1x1xf32>
    %345 = arith.mulf %344, %339 : f32
    %346 = arith.mulf %135, %333 : vector<2x128xf32>
    %347 = vector.shape_cast %346 : vector<2x128xf32> to vector<1x2x128xf32>
    %cst_116 = arith.constant dense<0.000000e+00> : vector<1xf32>
    %348 = vector.multi_reduction <add>, %347, %cst_116 [1, 2] : vector<1x2x128xf32> to vector<1xf32>
    %349 = vector.shape_cast %348 : vector<1xf32> to vector<1x1x1xf32>
    %350 = vector.extract %349[0, 0, 0] : f32 from vector<1x1x1xf32>
    %351 = arith.mulf %350, %339 : f32
    %352 = arith.mulf %345, %345 : f32
    %353 = arith.mulf %351, %351 : f32
    %354 = arith.addf %352, %353 : f32
    %355 = math.sqrt %354 : f32
    %cst_117 = arith.constant 1.1920929E-7 : f32
    %356 = arith.addf %355, %cst_117 : f32
    %cst_118 = arith.constant 1.000000e+00 : f32
    %357 = arith.divf %cst_118, %356 : f32
    %358 = arith.mulf %345, %357 : f32
    %359 = arith.mulf %351, %357 : f32
    %360 = vector.broadcast %358 : f32 to vector<2x128xf32>
    %361 = arith.mulf %132, %360 : vector<2x128xf32>
    %362 = vector.broadcast %359 : f32 to vector<2x128xf32>
    %363 = arith.mulf %135, %362 : vector<2x128xf32>
    %364 = arith.addf %361, %363 : vector<2x128xf32>
    %cst_119 = arith.constant -0.99999988 : f32
    %cst_120 = arith.constant 0.99999988 : f32
    %365 = vector.broadcast %cst_119 : f32 to vector<2x128xf32>
    %366 = arith.maximumf %365, %364 : vector<2x128xf32>
    %367 = vector.broadcast %cst_120 : f32 to vector<2x128xf32>
    %368 = arith.minimumf %367, %366 : vector<2x128xf32>
    %369 = math.absf %368 : vector<2x128xf32>
    %cst_121 = arith.constant 5.000000e-01 : f32
    %370 = vector.broadcast %cst_121 : f32 to vector<2x128xf32>
    %371 = arith.cmpf ogt, %369, %370 : vector<2x128xf32>
    %cst_122 = arith.constant 1.000000e+00 : f32
    %372 = vector.broadcast %cst_122 : f32 to vector<2x128xf32>
    %373 = arith.subf %372, %369 : vector<2x128xf32>
    %cst_123 = arith.constant 5.000000e-01 : f32
    %374 = vector.broadcast %cst_123 : f32 to vector<2x128xf32>
    %375 = arith.mulf %374, %373 : vector<2x128xf32>
    %376 = arith.mulf %368, %368 : vector<2x128xf32>
    %377 = arith.select %371, %375, %376 : vector<2x128xi1>, vector<2x128xf32>
    %378 = math.sqrt %377 : vector<2x128xf32>
    %379 = arith.select %371, %378, %368 : vector<2x128xi1>, vector<2x128xf32>
    %cst_124 = arith.constant 4.216320e-02 : f32
    %380 = vector.broadcast %cst_124 : f32 to vector<2x128xf32>
    %381 = arith.mulf %380, %377 : vector<2x128xf32>
    %cst_125 = arith.constant 0.024181312 : f32
    %382 = vector.broadcast %cst_125 : f32 to vector<2x128xf32>
    %383 = arith.addf %381, %382 : vector<2x128xf32>
    %384 = arith.mulf %383, %377 : vector<2x128xf32>
    %cst_126 = arith.constant 0.0454700254 : f32
    %385 = vector.broadcast %cst_126 : f32 to vector<2x128xf32>
    %386 = arith.addf %384, %385 : vector<2x128xf32>
    %387 = arith.mulf %386, %377 : vector<2x128xf32>
    %cst_127 = arith.constant 0.0749530047 : f32
    %388 = vector.broadcast %cst_127 : f32 to vector<2x128xf32>
    %389 = arith.addf %387, %388 : vector<2x128xf32>
    %390 = arith.mulf %389, %377 : vector<2x128xf32>
    %cst_128 = arith.constant 0.166667521 : f32
    %391 = vector.broadcast %cst_128 : f32 to vector<2x128xf32>
    %392 = arith.addf %390, %391 : vector<2x128xf32>
    %393 = arith.mulf %379, %377 : vector<2x128xf32>
    %394 = arith.mulf %393, %392 : vector<2x128xf32>
    %395 = arith.addf %379, %394 : vector<2x128xf32>
    %cst_129 = arith.constant 1.57079637 : f32
    %396 = vector.broadcast %cst_129 : f32 to vector<2x128xf32>
    %397 = arith.subf %396, %395 : vector<2x128xf32>
    %cst_130 = arith.constant 0.000000e+00 : f32
    %398 = vector.broadcast %cst_130 : f32 to vector<2x128xf32>
    %399 = arith.cmpf olt, %368, %398 : vector<2x128xf32>
    %cst_131 = arith.constant 2.000000e+00 : f32
    %400 = vector.broadcast %cst_131 : f32 to vector<2x128xf32>
    %401 = arith.mulf %400, %395 : vector<2x128xf32>
    %cst_132 = arith.constant 3.14159274 : f32
    %402 = vector.broadcast %cst_132 : f32 to vector<2x128xf32>
    %403 = arith.subf %402, %401 : vector<2x128xf32>
    %cst_133 = arith.constant 2.000000e+00 : f32
    %404 = vector.broadcast %cst_133 : f32 to vector<2x128xf32>
    %405 = arith.mulf %404, %395 : vector<2x128xf32>
    %406 = arith.select %399, %403, %405 : vector<2x128xi1>, vector<2x128xf32>
    %407 = arith.select %371, %406, %397 : vector<2x128xi1>, vector<2x128xf32>
    %cst_134 = arith.constant 0.000000e+00 : f32
    %408 = arith.cmpf ogt, %337, %cst_134 : f32
    %409 = arith.extui %408 : i1 to i32
    %410 = arith.sitofp %409 : i32 to f32
    %411 = arith.mulf %407, %407 : vector<2x128xf32>
    %412 = arith.mulf %411, %333 : vector<2x128xf32>
    %413 = vector.shape_cast %412 : vector<2x128xf32> to vector<1x2x128xf32>
    %cst_135 = arith.constant dense<0.000000e+00> : vector<1xf32>
    %414 = vector.multi_reduction <add>, %413, %cst_135 [1, 2] : vector<1x2x128xf32> to vector<1xf32>
    %415 = vector.shape_cast %414 : vector<1xf32> to vector<1x1x1xf32>
    %416 = vector.extract %415[0, 0, 0] : f32 from vector<1x1x1xf32>
    %417 = arith.mulf %410, %416 : f32
    %418 = arith.addf %321, %417 : f32
    %419 = arith.mulf %407, %333 : vector<2x128xf32>
    %420 = vector.shape_cast %419 : vector<2x128xf32> to vector<1x2x128xf32>
    %cst_136 = arith.constant dense<0.000000e+00> : vector<1xf32>
    %421 = vector.multi_reduction <add>, %420, %cst_136 [1, 2] : vector<1x2x128xf32> to vector<1xf32>
    %422 = vector.shape_cast %421 : vector<1xf32> to vector<1x1x1xf32>
    %423 = vector.extract %422[0, 0, 0] : f32 from vector<1x1x1xf32>
    %424 = arith.mulf %410, %423 : f32
    %425 = arith.addf %328, %424 : f32
    %426 = arith.addf %329, %337 : f32
    %c3_i32 = arith.constant 3 : i32
    %427 = tpu.iota {dimensions = array<i32: 1>} : vector<1x128xi32>
    %cst_137 = arith.constant 0.000000e+00 : f32
    %428 = vector.broadcast %cst_137 : f32 to vector<1x128xf32>
    %c0_i32_138 = arith.constant 0 : i32
    %429 = vector.broadcast %c0_i32_138 : i32 to vector<1x128xi32>
    %430 = arith.cmpi eq, %427, %429 : vector<1x128xi32>
    %431 = vector.broadcast %106 : f32 to vector<1x128xf32>
    %432 = arith.select %430, %431, %428 : vector<1x128xi1>, vector<1x128xf32>
    %c1_i32_139 = arith.constant 1 : i32
    %433 = vector.broadcast %c1_i32_139 : i32 to vector<1x128xi32>
    %434 = arith.cmpi eq, %427, %433 : vector<1x128xi32>
    %435 = vector.broadcast %112 : f32 to vector<1x128xf32>
    %436 = arith.select %434, %435, %432 : vector<1x128xi1>, vector<1x128xf32>
    %c2_i32_140 = arith.constant 2 : i32
    %437 = vector.broadcast %c2_i32_140 : i32 to vector<1x128xi32>
    %438 = arith.cmpi eq, %427, %437 : vector<1x128xi32>
    %439 = vector.broadcast %118 : f32 to vector<1x128xf32>
    %440 = arith.select %438, %439, %436 : vector<1x128xi1>, vector<1x128xf32>
    %c3_i32_141 = arith.constant 3 : i32
    %441 = vector.broadcast %c3_i32_141 : i32 to vector<1x128xi32>
    %442 = arith.cmpi eq, %427, %441 : vector<1x128xi32>
    %443 = vector.broadcast %123 : f32 to vector<1x128xf32>
    %444 = arith.select %442, %443, %440 : vector<1x128xi1>, vector<1x128xf32>
    %c4_i32 = arith.constant 4 : i32
    %445 = vector.broadcast %c4_i32 : i32 to vector<1x128xi32>
    %446 = arith.cmpi eq, %427, %445 : vector<1x128xi32>
    %447 = vector.broadcast %129 : f32 to vector<1x128xf32>
    %448 = arith.select %446, %447, %444 : vector<1x128xi1>, vector<1x128xf32>
    %c5_i32 = arith.constant 5 : i32
    %449 = vector.broadcast %c5_i32 : i32 to vector<1x128xi32>
    %450 = arith.cmpi eq, %427, %449 : vector<1x128xi32>
    %451 = vector.broadcast %418 : f32 to vector<1x128xf32>
    %452 = arith.select %450, %451, %448 : vector<1x128xi1>, vector<1x128xf32>
    %c6_i32 = arith.constant 6 : i32
    %453 = vector.broadcast %c6_i32 : i32 to vector<1x128xi32>
    %454 = arith.cmpi eq, %427, %453 : vector<1x128xi32>
    %455 = vector.broadcast %425 : f32 to vector<1x128xf32>
    %456 = arith.select %454, %455, %452 : vector<1x128xi1>, vector<1x128xf32>
    %c7_i32 = arith.constant 7 : i32
    %457 = vector.broadcast %c7_i32 : i32 to vector<1x128xi32>
    %458 = arith.cmpi eq, %427, %457 : vector<1x128xi32>
    %459 = vector.broadcast %426 : f32 to vector<1x128xf32>
    %460 = arith.select %458, %459, %456 : vector<1x128xi1>, vector<1x128xf32>
    %c0_142 = arith.constant 0 : index
    %c0_143 = arith.constant 0 : index
    %c0_144 = arith.constant 0 : index
    %461 = vector.load %arg12[%c0_142, %c0_143, %c0_144] : memref<1x1x128xf32, #tpu.memory_space<vmem>>, vector<1x1x128xf32>
    %462 = vector.shape_cast %461 : vector<1x1x128xf32> to vector<1x128xf32>
    %463 = vector.shape_cast %460 : vector<1x128xf32> to vector<1x1x128xf32>
    tpu.vector_store %arg12[%c0_142, %c0_143, %c0_144], %463 {strides = array<i32>} : memref<1x1x128xf32, #tpu.memory_space<vmem>>, vector<1x1x128xf32>,
    return
  }
  func.func @transform_0(%arg0: i32) -> (i32, i32) {
    %c0_i32 = arith.constant 0 : i32
    %c0_i32_0 = arith.constant 0 : i32
    %c0_i32_1 = arith.constant 0 : i32
    return %c0_i32, %c0_i32_0 : i32, i32
  }
  func.func @transform_1(%arg0: i32) -> (i32, i32, i32) {
    %c0_i32 = arith.constant 0 : i32
    %c0_i32_0 = arith.constant 0 : i32
    %c0_i32_1 = arith.constant 0 : i32
    return %arg0, %c0_i32, %c0_i32_0 : i32, i32, i32
  }
  func.func @transform_2(%arg0: i32) -> (i32, i32, i32) {
    %c0_i32 = arith.constant 0 : i32
    %c0_i32_0 = arith.constant 0 : i32
    %c0_i32_1 = arith.constant 0 : i32
    return %arg0, %c0_i32, %c0_i32_0 : i32, i32, i32
  }
  func.func @transform_3(%arg0: i32) -> (i32, i32, i32) {
    %c0_i32 = arith.constant 0 : i32
    %c0_i32_0 = arith.constant 0 : i32
    %c0_i32_1 = arith.constant 0 : i32
    return %arg0, %c0_i32, %c0_i32_0 : i32, i32, i32
  }
  func.func @transform_4(%arg0: i32) -> (i32, i32, i32) {
    %c0_i32 = arith.constant 0 : i32
    %c0_i32_0 = arith.constant 0 : i32
    %c0_i32_1 = arith.constant 0 : i32
    return %arg0, %c0_i32, %c0_i32_0 : i32, i32, i32
  }
  func.func @transform_5(%arg0: i32) -> (i32, i32, i32) {
    %c0_i32 = arith.constant 0 : i32
    %c0_i32_0 = arith.constant 0 : i32
    %c0_i32_1 = arith.constant 0 : i32
    return %arg0, %c0_i32, %c0_i32_0 : i32, i32, i32
  }
  func.func @transform_6(%arg0: i32) -> (i32, i32, i32) {
    %c0_i32 = arith.constant 0 : i32
    %c0_i32_0 = arith.constant 0 : i32
    %c0_i32_1 = arith.constant 0 : i32
    return %arg0, %c0_i32, %c0_i32_0 : i32, i32, i32
  }
  func.func @transform_7(%arg0: i32) -> (i32, i32, i32) {
    %c0_i32 = arith.constant 0 : i32
    %c0_i32_0 = arith.constant 0 : i32
    %c0_i32_1 = arith.constant 0 : i32
    return %arg0, %c0_i32, %c0_i32_0 : i32, i32, i32
  }
  func.func @transform_8(%arg0: i32) -> (i32, i32, i32) {
    %c0_i32 = arith.constant 0 : i32
    %c0_i32_0 = arith.constant 0 : i32
    %c0_i32_1 = arith.constant 0 : i32
    return %arg0, %c0_i32, %c0_i32_0 : i32, i32, i32
  }
  func.func @transform_9(%arg0: i32) -> (i32, i32, i32) {
    %c0_i32 = arith.constant 0 : i32
    %c0_i32_0 = arith.constant 0 : i32
    %c0_i32_1 = arith.constant 0 : i32
    return %arg0, %c0_i32, %c0_i32_0 : i32, i32, i32
  }
  func.func @transform_10(%arg0: i32) -> (i32, i32, i32, i32) {
    %c0_i32 = arith.constant 0 : i32
    %c0_i32_0 = arith.constant 0 : i32
    %c0_i32_1 = arith.constant 0 : i32
    %c0_i32_2 = arith.constant 0 : i32
    return %arg0, %c0_i32, %c0_i32_0, %c0_i32_1 : i32, i32, i32, i32
  }
  func.func @transform_11(%arg0: i32) -> (i32, i32, i32) {
    %c0_i32 = arith.constant 0 : i32
    %c0_i32_0 = arith.constant 0 : i32
    %c0_i32_1 = arith.constant 0 : i32
    return %arg0, %c0_i32, %c0_i32_0 : i32, i32, i32
  }
}

</mosaic_0001>

<llo_original>
// kernel: neg.0
$region0: #{neg.0}
  #allocation0 [shape = 's32[1]{0}', space=sflag, size = 0x4, scoped, tag = 'scoped memory for neg.0']
  %s0 = inlined_call_operand.vmem [shape: f32[2], index: 0, kind: input, shape index: {}]
  %s1 = inlined_call_operand.vmem [shape: f32[2], index: 1, kind: output, shape index: {}]
  %v2 = vld [vmem:[%s0] sm:$0x1]
  %3 = xla_tuple %v2
  %4 = xla_tuple %3
  %v5 = vxor.u32 %v2, 2147483648
  %6 = xla_tuple %v5
  %7 = vst [vmem:[%s1] sm:$0x1] %v5

// kernel: transformer_loss.1
$region0: #{transformer_loss.1}
  #allocation0 [shape = 'u32[]', space=smem, size = 0x4, offset = 0x4, fixed_abs, tag = 'smem constant byte address 0x4 - core index']
  #allocation1 [shape = 'u32[144,128]{1,0:T(1,128)}', space=vmem, size = 0x12000, scoped, tag = 'internal scratch']
  %s0 = inlined_call_operand.vmem [shape: f32[2,3], index: 0, kind: input, shape index: {}]
  %s1 = inlined_call_operand.vmem [shape: bf16[2,2,128], index: 1, kind: input, shape index: {}]
  %s2 = inlined_call_operand.vmem [shape: bf16[2,2,128], index: 2, kind: input, shape index: {}]
  %s3 = inlined_call_operand.vmem [shape: bf16[2,2,128], index: 3, kind: input, shape index: {}]
  %s4 = inlined_call_operand.vmem [shape: bf16[2,2,128], index: 4, kind: input, shape index: {}]
  %s5 = inlined_call_operand.vmem [shape: bf16[2,2,128], index: 5, kind: input, shape index: {}]
  %s6 = inlined_call_operand.vmem [shape: bf16[2,2,128], index: 6, kind: input, shape index: {}]
  %s7 = inlined_call_operand.vmem [shape: bf16[2,2,128], index: 7, kind: input, shape index: {}]
  %s8 = inlined_call_operand.vmem [shape: bf16[2,2,128], index: 8, kind: input, shape index: {}]
  %s9 = inlined_call_operand.vmem [shape: bf16[2,2,128], index: 9, kind: input, shape index: {}]
  %s10 = inlined_call_operand.vmem [shape: bf16[2,3,2,128], index: 10, kind: input, shape index: {}]
  %s11 = inlined_call_operand.vmem [shape: f32[2,1,128], index: 11, kind: output, shape index: {}]
  %s12 = sld [smem:[#allocation0]]
  $region81: #{transformer_loss.1} parent=0
    _
  %s14 = ssub.s32 1, %s12
  %s15 = scalar_select 0, %s14, %s12
  $region1: #{transformer_loss.1} parent=0
    #allocation2 [shape = 'u8[1024]{0}', space=smem, size = 0x400, scoped, tag = 'input window, operand 0, single buffered']
    #allocation3 [shape = 's32[2]{0}', space=sflag, size = 0x8, scoped, tag = 'scoped memory for transformer_loss.1']
    %16 = vsyncpa [#allocation3], 0
    loop: start=0, step=1, limit=4
    $region2: #{transformer_loss.1} parent=1 // loop_pre_header
      _
    $region3: #{transformer_loss.1} parent=1 // loop_header
      %s18 = sphi 0, %s22
      %p19 = scmp.ge.s32.totalorder %s18, 4
      %s26 = sphi 0, %s26
      %s28 = sphi 0, %s26
      %s29 = sphi 0, %s28
      %s43 = sphi 0, %s29
      %s49 = sphi 0, %s51
      %s52 = sphi 0, %s49
      %s53 = sphi 0, %s52
      %s69 = sphi 0, %s53
      %s75 = sphi 0, %s77
      %s78 = sphi 0, %s75
      %s79 = sphi 0, %s78
      %s95 = sphi 0, %s79
      %s101 = sphi 0, %s103
      %s104 = sphi 0, %s101
      %s105 = sphi 0, %s104
      %s121 = sphi 0, %s105
      %s127 = sphi 0, %s129
      %s130 = sphi 0, %s127
      %s131 = sphi 0, %s130
      %s147 = sphi 0, %s131
      %s153 = sphi 0, %s155
      %s156 = sphi 0, %s153
      %s157 = sphi 0, %s156
      %s173 = sphi 0, %s157
      %s179 = sphi 0, %s181
      %s182 = sphi 0, %s179
      %s183 = sphi 0, %s182
      %s199 = sphi 0, %s183
      %s205 = sphi 0, %s207
      %s208 = sphi 0, %s205
      %s209 = sphi 0, %s208
      %s225 = sphi 0, %s209
      %s231 = sphi 0, %s233
      %s234 = sphi 0, %s231
      %s235 = sphi 0, %s234
      %s251 = sphi 0, %s235
      %s257 = sphi 0, %s259
      %s260 = sphi 0, %s257
      %s261 = sphi 0, %s260
      %s277 = sphi 0, %s261
      %s283 = sphi 0, %s285
      %s286 = sphi 0, %s283
      %s287 = sphi 0, %s286
      %s303 = sphi 0, %s287
      %s309 = sphi 0, %s311
      %s312 = sphi 0, %s309
      %s313 = sphi 0, %s312
      %s329 = sphi 0, %s313
    $region4: #{transformer_loss.1} parent=1 // loop_header_branch
      %21 = sbr.rel (%p19) target = $region8
    $region5: #{transformer_loss.1} parent=1 // loop_body
      %s23 = ssub.s32 %s18, 1
      %s24 = ssub.s32 %s18, 2
      %s25 = sadd.s32 %s18, 1
      %s27 = sadd.s32 %s26, 1
      %p30 = scmp.eq.s32.totalorder %s18, 1
      %p31 = scmp.ne.s32.totalorder %s26, %s28
      %p32 = scmp.eq.s32.totalorder %s18, 0
      %p33 = por %p31, %p32
      %p34 = scmp.ne.s32.totalorder %s26, %s28
      %p35 = scmp.eq.s32.totalorder %s23, 1
      %p36 = por %p34, %p35
      %p37 = scmp.ne.s32.totalorder %s28, %s29
      %p38 = scmp.eq.s32.totalorder %s23, 0
      %p39 = por %p37, %p38
      %p40 = scmp.ne.s32.totalorder %s28, %s29
      %p41 = scmp.eq.s32.totalorder %s24, 1
      %p42 = por %p40, %p41
      %p44 = scmp.ne.s32.totalorder %s29, %s43
      %p45 = scmp.eq.s32.totalorder %s24, 0
      %p46 = por %p44, %p45
      %s47 = ssub.s32 %s18, %s25
      %p48 = scmp.eq.s32.totalorder %s47, 0
      %s50 = sadd.s32 %s49, 1
      %s51 = scalar_select %p48, %s49, %s50
      %p54 = pneg %p48
      %p55 = scmp.eq.s32.totalorder %s18, 1
      %p56 = por %p54, %p55
      %p57 = scmp.ne.s32.totalorder %s49, %s52
      %p58 = scmp.eq.s32.totalorder %s18, 0
      %p59 = por %p57, %p58
      %p60 = scmp.ne.s32.totalorder %s49, %s52
      %p61 = scmp.eq.s32.totalorder %s23, 1
      %p62 = por %p60, %p61
      %p63 = scmp.ne.s32.totalorder %s52, %s53
      %p64 = scmp.eq.s32.totalorder %s23, 0
      %p65 = por %p63, %p64
      %p66 = scmp.ne.s32.totalorder %s52, %s53
      %p67 = scmp.eq.s32.totalorder %s24, 1
      %p68 = por %p66, %p67
      %p70 = scmp.ne.s32.totalorder %s53, %s69
      %p71 = scmp.eq.s32.totalorder %s24, 0
      %p72 = por %p70, %p71
      %s73 = ssub.s32 %s18, %s25
      %p74 = scmp.eq.s32.totalorder %s73, 0
      %s76 = sadd.s32 %s75, 1
      %s77 = scalar_select %p74, %s75, %s76
      %p80 = pneg %p74
      %p81 = scmp.eq.s32.totalorder %s18, 1
      %p82 = por %p80, %p81
      %p83 = scmp.ne.s32.totalorder %s75, %s78
      %p84 = scmp.eq.s32.totalorder %s18, 0
      %p85 = por %p83, %p84
      %p86 = scmp.ne.s32.totalorder %s75, %s78
      %p87 = scmp.eq.s32.totalorder %s23, 1
      %p88 = por %p86, %p87
      %p89 = scmp.ne.s32.totalorder %s78, %s79
      %p90 = scmp.eq.s32.totalorder %s23, 0
      %p91 = por %p89, %p90
      %p92 = scmp.ne.s32.totalorder %s78, %s79
      %p93 = scmp.eq.s32.totalorder %s24, 1
      %p94 = por %p92, %p93
      %p96 = scmp.ne.s32.totalorder %s79, %s95
      %p97 = scmp.eq.s32.totalorder %s24, 0
      %p98 = por %p96, %p97
      %s99 = ssub.s32 %s18, %s25
      %p100 = scmp.eq.s32.totalorder %s99, 0
      %s102 = sadd.s32 %s101, 1
      %s103 = scalar_select %p100, %s101, %s102
      %p106 = pneg %p100
      %p107 = scmp.eq.s32.totalorder %s18, 1
      %p108 = por %p106, %p107
      %p109 = scmp.ne.s32.totalorder %s101, %s104
      %p110 = scmp.eq.s32.totalorder %s18, 0
      %p111 = por %p109, %p110
      %p112 = scmp.ne.s32.totalorder %s101, %s104
      %p113 = scmp.eq.s32.totalorder %s23, 1
      %p114 = por %p112, %p113
      %p115 = scmp.ne.s32.totalorder %s104, %s105
      %p116 = scmp.eq.s32.totalorder %s23, 0
      %p117 = por %p115, %p116
      %p118 = scmp.ne.s32.totalorder %s104, %s105
      %p119 = scmp.eq.s32.totalorder %s24, 1
      %p120 = por %p118, %p119
      %p122 = scmp.ne.s32.totalorder %s105, %s121
      %p123 = scmp.eq.s32.totalorder %s24, 0
      %p124 = por %p122, %p123
      %s125 = ssub.s32 %s18, %s25
      %p126 = scmp.eq.s32.totalorder %s125, 0
      %s128 = sadd.s32 %s127, 1
      %s129 = scalar_select %p126, %s127, %s128
      %p132 = pneg %p126
      %p133 = scmp.eq.s32.totalorder %s18, 1
      %p134 = por %p132, %p133
      %p135 = scmp.ne.s32.totalorder %s127, %s130
      %p136 = scmp.eq.s32.totalorder %s18, 0
      %p137 = por %p135, %p136
      %p138 = scmp.ne.s32.totalorder %s127, %s130
      %p139 = scmp.eq.s32.totalorder %s23, 1
      %p140 = por %p138, %p139
      %p141 = scmp.ne.s32.totalorder %s130, %s131
      %p142 = scmp.eq.s32.totalorder %s23, 0
      %p143 = por %p141, %p142
      %p144 = scmp.ne.s32.totalorder %s130, %s131
      %p145 = scmp.eq.s32.totalorder %s24, 1
      %p146 = por %p144, %p145
      %p148 = scmp.ne.s32.totalorder %s131, %s147
      %p149 = scmp.eq.s32.totalorder %s24, 0
      %p150 = por %p148, %p149
      %s151 = ssub.s32 %s18, %s25
      %p152 = scmp.eq.s32.totalorder %s151, 0
      %s154 = sadd.s32 %s153, 1
      %s155 = scalar_select %p152, %s153, %s154
      %p158 = pneg %p152
      %p159 = scmp.eq.s32.totalorder %s18, 1
      %p160 = por %p158, %p159
      %p161 = scmp.ne.s32.totalorder %s153, %s156
      %p162 = scmp.eq.s32.totalorder %s18, 0
      %p163 = por %p161, %p162
      %p164 = scmp.ne.s32.totalorder %s153, %s156
      %p165 = scmp.eq.s32.totalorder %s23, 1
      %p166 = por %p164, %p165
      %p167 = scmp.ne.s32.totalorder %s156, %s157
      %p168 = scmp.eq.s32.totalorder %s23, 0
      %p169 = por %p167, %p168
      %p170 = scmp.ne.s32.totalorder %s156, %s157
      %p171 = scmp.eq.s32.totalorder %s24, 1
      %p172 = por %p170, %p171
      %p174 = scmp.ne.s32.totalorder %s157, %s173
      %p175 = scmp.eq.s32.totalorder %s24, 0
      %p176 = por %p174, %p175
      %s177 = ssub.s32 %s18, %s25
      %p178 = scmp.eq.s32.totalorder %s177, 0
      %s180 = sadd.s32 %s179, 1
      %s181 = scalar_select %p178, %s179, %s180
      %p184 = pneg %p178
      %p185 = scmp.eq.s32.totalorder %s18, 1
      %p186 = por %p184, %p185
      %p187 = scmp.ne.s32.totalorder %s179, %s182
      %p188 = scmp.eq.s32.totalorder %s18, 0
      %p189 = por %p187, %p188
      %p190 = scmp.ne.s32.totalorder %s179, %s182
      %p191 = scmp.eq.s32.totalorder %s23, 1
      %p192 = por %p190, %p191
      %p193 = scmp.ne.s32.totalorder %s182, %s183
      %p194 = scmp.eq.s32.totalorder %s23, 0
      %p195 = por %p193, %p194
      %p196 = scmp.ne.s32.totalorder %s182, %s183
      %p197 = scmp.eq.s32.totalorder %s24, 1
      %p198 = por %p196, %p197
      %p200 = scmp.ne.s32.totalorder %s183, %s199
      %p201 = scmp.eq.s32.totalorder %s24, 0
      %p202 = por %p200, %p201
      %s203 = ssub.s32 %s18, %s25
      %p204 = scmp.eq.s32.totalorder %s203, 0
      %s206 = sadd.s32 %s205, 1
      %s207 = scalar_select %p204, %s205, %s206
      %p210 = pneg %p204
      %p211 = scmp.eq.s32.totalorder %s18, 1
      %p212 = por %p210, %p211
      %p213 = scmp.ne.s32.totalorder %s205, %s208
      %p214 = scmp.eq.s32.totalorder %s18, 0
      %p215 = por %p213, %p214
      %p216 = scmp.ne.s32.totalorder %s205, %s208
      %p217 = scmp.eq.s32.totalorder %s23, 1
      %p218 = por %p216, %p217
      %p219 = scmp.ne.s32.totalorder %s208, %s209
      %p220 = scmp.eq.s32.totalorder %s23, 0
      %p221 = por %p219, %p220
      %p222 = scmp.ne.s32.totalorder %s208, %s209
      %p223 = scmp.eq.s32.totalorder %s24, 1
      %p224 = por %p222, %p223
      %p226 = scmp.ne.s32.totalorder %s209, %s225
      %p227 = scmp.eq.s32.totalorder %s24, 0
      %p228 = por %p226, %p227
      %s229 = ssub.s32 %s18, %s25
      %p230 = scmp.eq.s32.totalorder %s229, 0
      %s232 = sadd.s32 %s231, 1
      %s233 = scalar_select %p230, %s231, %s232
      %p236 = pneg %p230
      %p237 = scmp.eq.s32.totalorder %s18, 1
      %p238 = por %p236, %p237
      %p239 = scmp.ne.s32.totalorder %s231, %s234
      %p240 = scmp.eq.s32.totalorder %s18, 0
      %p241 = por %p239, %p240
      %p242 = scmp.ne.s32.totalorder %s231, %s234
      %p243 = scmp.eq.s32.totalorder %s23, 1
      %p244 = por %p242, %p243
      %p245 = scmp.ne.s32.totalorder %s234, %s235
      %p246 = scmp.eq.s32.totalorder %s23, 0
      %p247 = por %p245, %p246
      %p248 = scmp.ne.s32.totalorder %s234, %s235
      %p249 = scmp.eq.s32.totalorder %s24, 1
      %p250 = por %p248, %p249
      %p252 = scmp.ne.s32.totalorder %s235, %s251
      %p253 = scmp.eq.s32.totalorder %s24, 0
      %p254 = por %p252, %p253
      %s255 = ssub.s32 %s18, %s25
      %p256 = scmp.eq.s32.totalorder %s255, 0
      %s258 = sadd.s32 %s257, 1
      %s259 = scalar_select %p256, %s257, %s258
      %p262 = pneg %p256
      %p263 = scmp.eq.s32.totalorder %s18, 1
      %p264 = por %p262, %p263
      %p265 = scmp.ne.s32.totalorder %s257, %s260
      %p266 = scmp.eq.s32.totalorder %s18, 0
      %p267 = por %p265, %p266
      %p268 = scmp.ne.s32.totalorder %s257, %s260
      %p269 = scmp.eq.s32.totalorder %s23, 1
      %p270 = por %p268, %p269
      %p271 = scmp.ne.s32.totalorder %s260, %s261
      %p272 = scmp.eq.s32.totalorder %s23, 0
      %p273 = por %p271, %p272
      %p274 = scmp.ne.s32.totalorder %s260, %s261
      %p275 = scmp.eq.s32.totalorder %s24, 1
      %p276 = por %p274, %p275
      %p278 = scmp.ne.s32.totalorder %s261, %s277
      %p279 = scmp.eq.s32.totalorder %s24, 0
      %p280 = por %p278, %p279
      %s281 = ssub.s32 %s18, %s25
      %p282 = scmp.eq.s32.totalorder %s281, 0
      %s284 = sadd.s32 %s283, 1
      %s285 = scalar_select %p282, %s283, %s284
      %p288 = pneg %p282
      %p289 = scmp.eq.s32.totalorder %s18, 1
      %p290 = por %p288, %p289
      %p291 = scmp.ne.s32.totalorder %s283, %s286
      %p292 = scmp.eq.s32.totalorder %s18, 0
      %p293 = por %p291, %p292
      %p294 = scmp.ne.s32.totalorder %s283, %s286
      %p295 = scmp.eq.s32.totalorder %s23, 1
      %p296 = por %p294, %p295
      %p297 = scmp.ne.s32.totalorder %s286, %s287
      %p298 = scmp.eq.s32.totalorder %s23, 0
      %p299 = por %p297, %p298
      %p300 = scmp.ne.s32.totalorder %s286, %s287
      %p301 = scmp.eq.s32.totalorder %s24, 1
      %p302 = por %p300, %p301
      %p304 = scmp.ne.s32.totalorder %s287, %s303
      %p305 = scmp.eq.s32.totalorder %s24, 0
      %p306 = por %p304, %p305
      %s307 = ssub.s32 %s18, %s25
      %p308 = scmp.eq.s32.totalorder %s307, 0
      %s310 = sadd.s32 %s309, 1
      %s311 = scalar_select %p308, %s309, %s310
      %p314 = pneg %p308
      %p315 = scmp.eq.s32.totalorder %s18, 1
      %p316 = por %p314, %p315
      %p317 = scmp.ne.s32.totalorder %s309, %s312
      %p318 = scmp.eq.s32.totalorder %s18, 0
      %p319 = por %p317, %p318
      %p320 = scmp.ne.s32.totalorder %s309, %s312
      %p321 = scmp.eq.s32.totalorder %s23, 1
      %p322 = por %p320, %p321
      %p323 = scmp.ne.s32.totalorder %s312, %s313
      %p324 = scmp.eq.s32.totalorder %s23, 0
      %p325 = por %p323, %p324
      %p326 = scmp.ne.s32.totalorder %s312, %s313
      %p327 = scmp.eq.s32.totalorder %s24, 1
      %p328 = por %p326, %p327
      %p330 = scmp.ne.s32.totalorder %s313, %s329
      %p331 = scmp.eq.s32.totalorder %s24, 0
      %p332 = por %p330, %p331
      %p333 = scmp.le.s32.totalorder 1, %s18
      %p334 = scmp.lt.s32.totalorder %s18, 3
      %p335 = pnand %p333, %p334
      %p336 = pneg %p335
      // Predicated region
      $region9: #{transformer_loss.1} parent=5 // pred_check
        _
      $region10: #{transformer_loss.1} parent=5 // pred_check_branch
        %338 = sbr.rel (%p335) target = $region12
      $region11: #{transformer_loss.1} parent=5 // pred_region
        %s339 = ssub.s32 %s18, 1
        // Predicated region
        $region13: #{transformer_loss.1} parent=11 // pred_check
          %p340 = pneg %p39
        $region14: #{transformer_loss.1} parent=11 // pred_check_branch
          %342 = sbr.rel (%p340) target = $region16
        $region15: #{transformer_loss.1} parent=11 // pred_region
          %s344 = ssub.s32 32, 32
          %345 = vsyncadd [#allocation3], %s344
          %s347 = sshll.u32 %s0, 4
          %s348 = int_to_ptr.vmem [resolvable:$true] %s347
          %350 = dma.vmem_to_smem %s348, 32, [#allocation2], [#allocation3]
        $region16: #{transformer_loss.1} parent=11 // pred_fallthru
          _
      $region12: #{transformer_loss.1} parent=5 // pred_fallthru
        _
      %p351 = scmp.lt.s32.totalorder %s18, 2
      // Predicated region
      $region17: #{transformer_loss.1} parent=5 // pred_check
        %p352 = pneg %p351
      $region18: #{transformer_loss.1} parent=5 // pred_check_branch
        %354 = sbr.rel (%p352) target = $region20
      $region19: #{transformer_loss.1} parent=5 // pred_region
        // Predicated region
        $region21: #{transformer_loss.1} parent=19 // pred_check
          %p355 = pneg %p59
        $region22: #{transformer_loss.1} parent=19 // pred_check_branch
          %357 = sbr.rel (%p355) target = $region24
        $region23: #{transformer_loss.1} parent=19 // pred_region
          %p358 = scmp.lt.s32.totalorder %s18, 1
          %s359 = scalar_select %p358, %s18, 1
          %s360 = scalar_lea.vmem %s1, %s359
        $region24: #{transformer_loss.1} parent=19 // pred_fallthru
          _
        // Predicated region
        $region25: #{transformer_loss.1} parent=19 // pred_check
          %p361 = pneg %p85
        $region26: #{transformer_loss.1} parent=19 // pred_check_branch
          %363 = sbr.rel (%p361) target = $region28
        $region27: #{transformer_loss.1} parent=19 // pred_region
          %p364 = scmp.lt.s32.totalorder %s18, 1
          %s365 = scalar_select %p364, %s18, 1
          %s366 = scalar_lea.vmem %s2, %s365
        $region28: #{transformer_loss.1} parent=19 // pred_fallthru
          _
        // Predicated region
        $region29: #{transformer_loss.1} parent=19 // pred_check
          %p367 = pneg %p111
        $region30: #{transformer_loss.1} parent=19 // pred_check_branch
          %369 = sbr.rel (%p367) target = $region32
        $region31: #{transformer_loss.1} parent=19 // pred_region
          %p370 = scmp.lt.s32.totalorder %s18, 1
          %s371 = scalar_select %p370, %s18, 1
          %s372 = scalar_lea.vmem %s3, %s371
        $region32: #{transformer_loss.1} parent=19 // pred_fallthru
          _
        // Predicated region
        $region33: #{transformer_loss.1} parent=19 // pred_check
          %p373 = pneg %p137
        $region34: #{transformer_loss.1} parent=19 // pred_check_branch
          %375 = sbr.rel (%p373) target = $region36
        $region35: #{transformer_loss.1} parent=19 // pred_region
          %p376 = scmp.lt.s32.totalorder %s18, 1
          %s377 = scalar_select %p376, %s18, 1
          %s378 = scalar_lea.vmem %s4, %s377
        $region36: #{transformer_loss.1} parent=19 // pred_fallthru
          _
        // Predicated region
        $region37: #{transformer_loss.1} parent=19 // pred_check
          %p379 = pneg %p163
        $region38: #{transformer_loss.1} parent=19 // pred_check_branch
          %381 = sbr.rel (%p379) target = $region40
        $region39: #{transformer_loss.1} parent=19 // pred_region
          %p382 = scmp.lt.s32.totalorder %s18, 1
          %s383 = scalar_select %p382, %s18, 1
          %s384 = scalar_lea.vmem %s5, %s383
        $region40: #{transformer_loss.1} parent=19 // pred_fallthru
          _
        // Predicated region
        $region41: #{transformer_loss.1} parent=19 // pred_check
          %p385 = pneg %p189
        $region42: #{transformer_loss.1} parent=19 // pred_check_branch
          %387 = sbr.rel (%p385) target = $region44
        $region43: #{transformer_loss.1} parent=19 // pred_region
          %p388 = scmp.lt.s32.totalorder %s18, 1
          %s389 = scalar_select %p388, %s18, 1
          %s390 = scalar_lea.vmem %s6, %s389
        $region44: #{transformer_loss.1} parent=19 // pred_fallthru
          _
        // Predicated region
        $region45: #{transformer_loss.1} parent=19 // pred_check
          %p391 = pneg %p215
        $region46: #{transformer_loss.1} parent=19 // pred_check_branch
          %393 = sbr.rel (%p391) target = $region48
        $region47: #{transformer_loss.1} parent=19 // pred_region
          %p394 = scmp.lt.s32.totalorder %s18, 1
          %s395 = scalar_select %p394, %s18, 1
          %s396 = scalar_lea.vmem %s7, %s395
        $region48: #{transformer_loss.1} parent=19 // pred_fallthru
          _
        // Predicated region
        $region49: #{transformer_loss.1} parent=19 // pred_check
          %p397 = pneg %p241
        $region50: #{transformer_loss.1} parent=19 // pred_check_branch
          %399 = sbr.rel (%p397) target = $region52
        $region51: #{transformer_loss.1} parent=19 // pred_region
          %p400 = scmp.lt.s32.totalorder %s18, 1
          %s401 = scalar_select %p400, %s18, 1
          %s402 = scalar_lea.vmem %s8, %s401
        $region52: #{transformer_loss.1} parent=19 // pred_fallthru
          _
        // Predicated region
        $region53: #{transformer_loss.1} parent=19 // pred_check
          %p403 = pneg %p267
        $region54: #{transformer_loss.1} parent=19 // pred_check_branch
          %405 = sbr.rel (%p403) target = $region56
        $region55: #{transformer_loss.1} parent=19 // pred_region
          %p406 = scmp.lt.s32.totalorder %s18, 1
          %s407 = scalar_select %p406, %s18, 1
          %s408 = scalar_lea.vmem %s9, %s407
        $region56: #{transformer_loss.1} parent=19 // pred_fallthru
          _
        // Predicated region
        $region57: #{transformer_loss.1} parent=19 // pred_check
          %p409 = pneg %p293
        $region58: #{transformer_loss.1} parent=19 // pred_check_branch
          %411 = sbr.rel (%p409) target = $region60
        $region59: #{transformer_loss.1} parent=19 // pred_region
          %p412 = scmp.lt.s32.totalorder %s18, 1
          %s413 = scalar_select %p412, %s18, 1
          %s414 = smul.addr %s413, 3
          %s415 = scalar_lea.vmem %s10, %s414
        $region60: #{transformer_loss.1} parent=19 // pred_fallthru
          _
      $region20: #{transformer_loss.1} parent=5 // pred_fallthru
        _
      %p416 = scmp.le.s32.totalorder 1, %s18
      %p417 = scmp.lt.s32.totalorder %s18, 3
      %p418 = pnand %p416, %p417
      %p419 = pneg %p418
      // Predicated region
      $region61: #{transformer_loss.1} parent=5 // pred_check
        _
      $region62: #{transformer_loss.1} parent=5 // pred_check_branch
        %421 = sbr.rel (%p418) target = $region64
      $region63: #{transformer_loss.1} parent=5 // pred_region
        %s422 = ssub.s32 %s18, 1
        // Predicated region
        $region65: #{transformer_loss.1} parent=63 // pred_check
          %p423 = pneg %p39
        $region66: #{transformer_loss.1} parent=63 // pred_check_branch
          %425 = sbr.rel (%p423) target = $region68
        $region67: #{transformer_loss.1} parent=63 // pred_region
          %426 = dma.done [#allocation3], 32
        $region68: #{transformer_loss.1} parent=63 // pred_fallthru
          _
        %427 = sfence
        %p428 = pneg %p39
        %p429 = pneg %p36
        %p430 = scmp.lt.s32.totalorder %s23, 1
        %s431 = scalar_select %p430, %s23, 1
        %s432 = scalar_lea.vmem %s1, %s431
        %p433 = pneg %p65
        %p434 = pneg %p62
        %p435 = scmp.lt.s32.totalorder %s23, 1
        %s436 = scalar_select %p435, %s23, 1
        %s437 = scalar_lea.vmem %s2, %s436
        %p438 = pneg %p91
        %p439 = pneg %p88
        %p440 = scmp.lt.s32.totalorder %s23, 1
        %s441 = scalar_select %p440, %s23, 1
        %s442 = scalar_lea.vmem %s3, %s441
        %p443 = pneg %p117
        %p444 = pneg %p114
        %p445 = scmp.lt.s32.totalorder %s23, 1
        %s446 = scalar_select %p445, %s23, 1
        %s447 = scalar_lea.vmem %s4, %s446
        %p448 = pneg %p143
        %p449 = pneg %p140
        %p450 = scmp.lt.s32.totalorder %s23, 1
        %s451 = scalar_select %p450, %s23, 1
        %s452 = scalar_lea.vmem %s5, %s451
        %p453 = pneg %p169
        %p454 = pneg %p166
        %p455 = scmp.lt.s32.totalorder %s23, 1
        %s456 = scalar_select %p455, %s23, 1
        %s457 = scalar_lea.vmem %s6, %s456
        %p458 = pneg %p195
        %p459 = pneg %p192
        %p460 = scmp.lt.s32.totalorder %s23, 1
        %s461 = scalar_select %p460, %s23, 1
        %s462 = scalar_lea.vmem %s7, %s461
        %p463 = pneg %p221
        %p464 = pneg %p218
        %p465 = scmp.lt.s32.totalorder %s23, 1
        %s466 = scalar_select %p465, %s23, 1
        %s467 = scalar_lea.vmem %s8, %s466
        %p468 = pneg %p247
        %p469 = pneg %p244
        %p470 = scmp.lt.s32.totalorder %s23, 1
        %s471 = scalar_select %p470, %s23, 1
        %s472 = scalar_lea.vmem %s9, %s471
        %p473 = pneg %p273
        %p474 = pneg %p270
        %p475 = scmp.lt.s32.totalorder %s23, 1
        %s476 = scalar_select %p475, %s23, 1
        %s477 = smul.addr %s476, 3
        %s478 = scalar_lea.vmem %s10, %s477
        %p479 = pneg %p299
        %p480 = pneg %p296
        %p481 = pneg %p325
        %p482 = pneg %p322
        %p483 = scmp.lt.s32.totalorder %s23, 1
        %s484 = scalar_select %p483, %s23, 1
        %s485 = scalar_lea.vmem %s11, %s484
        %p486 = scmp.lt.s32.totalorder %s23, 1
        %s487 = scalar_select %p486, %s23, 1
        %s488 = scalar_lea.vmem %s1, %s487
        %p489 = scmp.lt.s32.totalorder %s23, 1
        %s490 = scalar_select %p489, %s23, 1
        %s491 = scalar_lea.vmem %s2, %s490
        %p492 = scmp.lt.s32.totalorder %s23, 1
        %s493 = scalar_select %p492, %s23, 1
        %s494 = scalar_lea.vmem %s3, %s493
        %p495 = scmp.lt.s32.totalorder %s23, 1
        %s496 = scalar_select %p495, %s23, 1
        %s497 = scalar_lea.vmem %s4, %s496
        %p498 = scmp.lt.s32.totalorder %s23, 1
        %s499 = scalar_select %p498, %s23, 1
        %s500 = scalar_lea.vmem %s5, %s499
        %p501 = scmp.lt.s32.totalorder %s23, 1
        %s502 = scalar_select %p501, %s23, 1
        %s503 = scalar_lea.vmem %s6, %s502
        %p504 = scmp.lt.s32.totalorder %s23, 1
        %s505 = scalar_select %p504, %s23, 1
        %s506 = scalar_lea.vmem %s7, %s505
        %p507 = scmp.lt.s32.totalorder %s23, 1
        %s508 = scalar_select %p507, %s23, 1
        %s509 = scalar_lea.vmem %s8, %s508
        %p510 = scmp.lt.s32.totalorder %s23, 1
        %s511 = scalar_select %p510, %s23, 1
        %s512 = scalar_lea.vmem %s9, %s511
        %p513 = scmp.lt.s32.totalorder %s23, 1
        %s514 = scalar_select %p513, %s23, 1
        %s515 = smul.addr %s514, 3
        %s516 = scalar_lea.vmem %s10, %s515
        %p517 = scmp.lt.s32.totalorder %s23, 1
        %s518 = scalar_select %p517, %s23, 1
        %s519 = scalar_lea.vmem %s11, %s518
        %s520 = smul.u32 %s23, 128
        %s521 = sld [smem:[#allocation2 + %s520]]
        %s522 = sadd.s32 %s520, 1
        %s523 = sld [smem:[#allocation2 + %s522]]
        %s524 = sadd.s32 %s520, 2
        %s525 = sld [smem:[#allocation2 + %s524]]
        %v526 = vld [vmem:[%s488] sm:$0x1]
        %v527 = vunpack.c.l.bf16 %v526
        %v528 = vld [vmem:[%s491] sm:$0x1]
        %v529 = vunpack.c.l.bf16 %v528
        %v530 = vld [vmem:[%s494] sm:$0x1]
        %v531 = vunpack.c.l.bf16 %v530
        %v532 = vld [vmem:[%s497] sm:$0x1]
        %v533 = vunpack.c.l.bf16 %v532
        %v534 = vld [vmem:[%s500] sm:$0x1]
        %v535 = vunpack.c.l.bf16 %v534
        %v536 = vld [vmem:[%s503] sm:$0x1]
        %v537 = vunpack.c.l.bf16 %v536
        %v538 = vld [vmem:[%s506] sm:$0x1]
        %v539 = vunpack.c.l.bf16 %v538
        %v540 = vstv %s521
        %v541 = vmul.f32 %v527, %v540
        %v542 = vstv %s523
        %v543 = vmul.f32 %v529, %v542
        %v544 = vsub.f32 %v541, %v543
        %v545 = vmul.f32 %v527, %v542
        %v546 = vmul.f32 %v529, %v540
        %v547 = vadd.f32 %v545, %v546
        %v548 = vstv %s525
        %v549 = vmul.f32 %v531, %v548
        %v550 = vmul.f32 %v544, %v544
        %v551 = vmul.f32 %v547, %v547
        %v552 = vadd.f32 %v550, %v551
        %v553 = vrsqrt.pop %v552
        %v554 = vmul.f32 %v552, %v553
        %vm555 = vcmp.eq.f32.partialorder %v552, inf
        %v556 = vsel %vm555, %v552, %v554
        %vm557 = vcmp.eq.f32.partialorder %v552, 0.0
        %v558 = vand.u32 %v552, 2147483648
        %v559 = vsel %vm557, %v558, %v556
        %v560 = vadd.f32 %v559, 1.1920929e-07
        %v561 = vrcp.pop %v560
        %v562 = vmul.f32 %v544, %v561
        %v563 = vmul.f32 %v547, %v561
        %v564 = vmul.f32 %v562, %v533
        %v565 = vmul.f32 %v563, %v535
        %v566 = vadd.f32 %v564, %v565
        %v567 = vsub.f32 1.0, %v566
        %v568 = vmax.f32 %v566, -0.9999999
        %v569 = vmin.f32 %v568, 0.9999999
        %v570 = vand.u32 2147483647, %v569
        %vm571 = vcmp.gt.f32.partialorder %v570, 0.5
        %v572 = vsub.f32 1.0, %v570
        %v573 = vmul.f32 %v572, 0.5
        %v574 = vmul.f32 %v569, %v569
        %v575 = vsel %vm571, %v573, %v574
        %v576 = vrsqrt.pop %v575
        %v577 = vmul.f32 %v575, %v576
        %vm578 = vcmp.eq.f32.partialorder %v575, inf
        %v579 = vsel %vm578, %v575, %v577
        %vm580 = vcmp.eq.f32.partialorder %v575, 0.0
        %v581 = vand.u32 %v575, 2147483648
        %v582 = vsel %vm580, %v581, %v579
        %v583 = vsel %vm571, %v582, %v569
        %v584 = vmul.f32 %v575, 0.0421632
        %v585 = vadd.f32 %v584, 0.024181312
        %v586 = vmul.f32 %v585, %v575
        %v587 = vadd.f32 %v586, 0.045470025
        %v588 = vmul.f32 %v587, %v575
        %v589 = vadd.f32 %v588, 0.074953005
        %v590 = vmul.f32 %v589, %v575
        %v591 = vadd.f32 %v590, 0.16666752
        %v592 = vmul.f32 %v583, %v575
        %v593 = vmul.f32 %v592, %v591
        %v594 = vadd.f32 %v583, %v593
        %v595 = vsub.f32 1.5707964, %v594
        %vm596 = vcmp.lt.f32.partialorder %v569, 0.0
        %v597 = vmul.f32 %v594, 2.0
        %v598 = vsub.f32 3.1415927, %v597
        %v599 = vsel %vm596, %v598, %v597
        %v600 = vsel %vm571, %v599, %v595
        %v601 = vadd.f32 %v537, 1.1920929e-07
        %v602 = vrcp.pop %v601
        %v603 = vmul.f32 %v549, %v602
        %v604 = vadd.f32 %v603, 1.1920929e-07
        %v605 = vlog2.pop %v604
        %v606 = vmul.f32 %v605, 0.6931472
        %vm607 = vcmask 1041408
        %v608 = vsel %vm607, %v539, 0.0
        %609 = vadd.xlane.f32.xlu0 %v608
        %v610 = vpop.xlane.xlu0 %609
        %v611 = vrot.slane %v610, 4
        %v612 = vadd.f32 %v610, %v611
        %v613 = vrot.slane %v612, 2
        %v614 = vadd.f32 %v612, %v613
        %v615 = vrot.slane %v614, 1
        %v616 = vadd.f32 %v614, %v615
        %s617 = vtos %v616
        %v618 = vmul.f32 %v567, %v567
        %v619 = vmul.f32 %v618, %v539
        %v620 = vsel %vm607, %v619, 0.0
        %621 = vadd.xlane.f32.xlu0 %v620
        %v622 = vpop.xlane.xlu0 %621
        %v623 = vrot.slane %v622, 4
        %v624 = vadd.f32 %v622, %v623
        %v625 = vrot.slane %v624, 2
        %v626 = vadd.f32 %v624, %v625
        %v627 = vrot.slane %v626, 1
        %v628 = vadd.f32 %v626, %v627
        %s629 = vtos %v628
        %v630 = vmul.f32 %v606, %v606
        %v631 = vmul.f32 %v630, %v539
        %v632 = vsel %vm607, %v631, 0.0
        %633 = vadd.xlane.f32.xlu0 %v632
        %v634 = vpop.xlane.xlu0 %633
        %v635 = vrot.slane %v634, 4
        %v636 = vadd.f32 %v634, %v635
        %v637 = vrot.slane %v636, 2
        %v638 = vadd.f32 %v636, %v637
        %v639 = vrot.slane %v638, 1
        %v640 = vadd.f32 %v638, %v639
        %s641 = vtos %v640
        %v642 = vmul.f32 %v600, %v539
        %v643 = vsel %vm607, %v642, 0.0
        %644 = vadd.xlane.f32.xlu0 %v643
        %v645 = vpop.xlane.xlu0 %644
        %v646 = vrot.slane %v645, 4
        %v647 = vadd.f32 %v645, %v646
        %v648 = vrot.slane %v647, 2
        %v649 = vadd.f32 %v647, %v648
        %v650 = vrot.slane %v649, 1
        %v651 = vadd.f32 %v649, %v650
        %s652 = vtos %v651
        %v653 = vand.u32 2147483647, %v606
        %v654 = vmul.f32 %v653, %v539
        %v655 = vsel %vm607, %v654, 0.0
        %656 = vadd.xlane.f32.xlu0 %v655
        %v657 = vpop.xlane.xlu0 %656
        %v658 = vrot.slane %v657, 4
        %v659 = vadd.f32 %v657, %v658
        %v660 = vrot.slane %v659, 2
        %v661 = vadd.f32 %v659, %v660
        %v662 = vrot.slane %v661, 1
        %v663 = vadd.f32 %v661, %v662
        %s664 = vtos %v663
        %v665 = vld [vmem:[%s509] sm:$0x1]
        %v666 = vunpack.c.l.bf16 %v665
        %v667 = vld [vmem:[%s512] sm:$0x1]
        %v668 = vunpack.c.l.bf16 %v667
        %v669 = vld [vmem:[%s516] sm:$0x1]
        %v670 = vunpack.c.l.bf16 %v669
        %v671 = vsel %vm607, %v670, 0.0
        %672 = vadd.xlane.f32.xlu0 %v671
        %v673 = vpop.xlane.xlu0 %672
        %v674 = vrot.slane %v673, 4
        %v675 = vadd.f32 %v673, %v674
        %v676 = vrot.slane %v675, 2
        %v677 = vadd.f32 %v675, %v676
        %v678 = vrot.slane %v677, 1
        %v679 = vadd.f32 %v677, %v678
        %s680 = vtos %v679
        %s681 = sadd.f32 %s680, 1.1920929e-07
        %v682 = vstv %s681
        %v683 = vrcp.pop %v682
        %s684 = vtos %v683
        %v685 = vmul.f32 %v666, %v670
        %v686 = vsel %vm607, %v685, 0.0
        %687 = vadd.xlane.f32.xlu0 %v686
        %v688 = vpop.xlane.xlu0 %687
        %v689 = vrot.slane %v688, 4
        %v690 = vadd.f32 %v688, %v689
        %v691 = vrot.slane %v690, 2
        %v692 = vadd.f32 %v690, %v691
        %v693 = vrot.slane %v692, 1
        %v694 = vadd.f32 %v692, %v693
        %s695 = vtos %v694
        %s696 = smul.f32 %s695, %s684
        %v697 = vmul.f32 %v668, %v670
        %v698 = vsel %vm607, %v697, 0.0
        %699 = vadd.xlane.f32.xlu0 %v698
        %v700 = vpop.xlane.xlu0 %699
        %v701 = vrot.slane %v700, 4
        %v702 = vadd.f32 %v700, %v701
        %v703 = vrot.slane %v702, 2
        %v704 = vadd.f32 %v702, %v703
        %v705 = vrot.slane %v704, 1
        %v706 = vadd.f32 %v704, %v705
        %s707 = vtos %v706
        %s708 = smul.f32 %s707, %s684
        %s709 = smul.f32 %s696, %s696
        %s710 = smul.f32 %s708, %s708
        %s711 = sadd.f32 %s709, %s710
        %v712 = vstv %s711
        %v713 = vrsqrt.pop %v712
        %v714 = vmul.f32 %v712, %v713
        %vm715 = vcmp.eq.f32.partialorder %v712, inf
        %v716 = vsel %vm715, %v712, %v714
        %vm717 = vcmp.eq.f32.partialorder %v712, 0.0
        %v718 = vand.u32 %v712, 2147483648
        %v719 = vsel %vm717, %v718, %v716
        %s720 = vtos %v719
        %s721 = sadd.f32 %s720, 1.1920929e-07
        %v722 = vstv %s721
        %v723 = vrcp.pop %v722
        %s724 = vtos %v723
        %s725 = smul.f32 %s696, %s724
        %s726 = smul.f32 %s708, %s724
        %v727 = vstv %s725
        %v728 = vmul.f32 %v666, %v727
        %v729 = vstv %s726
        %v730 = vmul.f32 %v668, %v729
        %v731 = vadd.f32 %v728, %v730
        %v732 = vmax.f32 %v731, -0.9999999
        %v733 = vmin.f32 %v732, 0.9999999
        %v734 = vand.u32 2147483647, %v733
        %vm735 = vcmp.gt.f32.partialorder %v734, 0.5
        %v736 = vsub.f32 1.0, %v734
        %v737 = vmul.f32 %v736, 0.5
        %v738 = vmul.f32 %v733, %v733
        %v739 = vsel %vm735, %v737, %v738
        %v740 = vrsqrt.pop %v739
        %v741 = vmul.f32 %v739, %v740
        %vm742 = vcmp.eq.f32.partialorder %v739, inf
        %v743 = vsel %vm742, %v739, %v741
        %vm744 = vcmp.eq.f32.partialorder %v739, 0.0
        %v745 = vand.u32 %v739, 2147483648
        %v746 = vsel %vm744, %v745, %v743
        %v747 = vsel %vm735, %v746, %v733
        %v748 = vmul.f32 %v739, 0.0421632
        %v749 = vadd.f32 %v748, 0.024181312
        %v750 = vmul.f32 %v749, %v739
        %v751 = vadd.f32 %v750, 0.045470025
        %v752 = vmul.f32 %v751, %v739
        %v753 = vadd.f32 %v752, 0.074953005
        %v754 = vmul.f32 %v753, %v739
        %v755 = vadd.f32 %v754, 0.16666752
        %v756 = vmul.f32 %v747, %v739
        %v757 = vmul.f32 %v756, %v755
        %v758 = vadd.f32 %v747, %v757
        %v759 = vsub.f32 1.5707964, %v758
        %vm760 = vcmp.lt.f32.partialorder %v733, 0.0
        %v761 = vmul.f32 %v758, 2.0
        %v762 = vsub.f32 3.1415927, %v761
        %v763 = vsel %vm760, %v762, %v761
        %v764 = vsel %vm735, %v763, %v759
        %p765 = scmp.gt.f32.partialorder %s680, 0.0
        %s766 = scalar_select %p765, 1, 0
        %s767 = scvt.s32.f32 %s766
        %v768 = vmul.f32 %v764, %v764
        %v769 = vmul.f32 %v768, %v670
        %v770 = vsel %vm607, %v769, 0.0
        %771 = vadd.xlane.f32.xlu0 %v770
        %v772 = vpop.xlane.xlu0 %771
        %v773 = vrot.slane %v772, 4
        %v774 = vadd.f32 %v772, %v773
        %v775 = vrot.slane %v774, 2
        %v776 = vadd.f32 %v774, %v775
        %v777 = vrot.slane %v776, 1
        %v778 = vadd.f32 %v776, %v777
        %s779 = vtos %v778
        %s780 = smul.f32 %s767, %s779
        %s781 = sadd.f32 %s780, 0.0
        %v782 = vmul.f32 %v764, %v670
        %v783 = vsel %vm607, %v782, 0.0
        %784 = vadd.xlane.f32.xlu0 %v783
        %v785 = vpop.xlane.xlu0 %784
        %v786 = vrot.slane %v785, 4
        %v787 = vadd.f32 %v785, %v786
        %v788 = vrot.slane %v787, 2
        %v789 = vadd.f32 %v787, %v788
        %v790 = vrot.slane %v789, 1
        %v791 = vadd.f32 %v789, %v790
        %s792 = vtos %v791
        %s793 = smul.f32 %s767, %s792
        %s794 = sadd.f32 %s793, 0.0
        %s795 = sadd.f32 %s680, 0.0
        %s796 = scalar_lea.vmem %s516, 1
        %v797 = vld [vmem:[%s796] sm:$0x1]
        %v798 = vunpack.c.l.bf16 %v797
        %v799 = vsel %vm607, %v798, 0.0
        %800 = vadd.xlane.f32.xlu0 %v799
        %v801 = vpop.xlane.xlu0 %800
        %v802 = vrot.slane %v801, 4
        %v803 = vadd.f32 %v801, %v802
        %v804 = vrot.slane %v803, 2
        %v805 = vadd.f32 %v803, %v804
        %v806 = vrot.slane %v805, 1
        %v807 = vadd.f32 %v805, %v806
        %s808 = vtos %v807
        %s809 = sadd.f32 %s808, 1.1920929e-07
        %v810 = vstv %s809
        %v811 = vrcp.pop %v810
        %s812 = vtos %v811
        %v813 = vmul.f32 %v666, %v798
        %v814 = vsel %vm607, %v813, 0.0
        %815 = vadd.xlane.f32.xlu0 %v814
        %v816 = vpop.xlane.xlu0 %815
        %v817 = vrot.slane %v816, 4
        %v818 = vadd.f32 %v816, %v817
        %v819 = vrot.slane %v818, 2
        %v820 = vadd.f32 %v818, %v819
        %v821 = vrot.slane %v820, 1
        %v822 = vadd.f32 %v820, %v821
        %s823 = vtos %v822
        %s824 = smul.f32 %s823, %s812
        %v825 = vmul.f32 %v668, %v798
        %v826 = vsel %vm607, %v825, 0.0
        %827 = vadd.xlane.f32.xlu0 %v826
        %v828 = vpop.xlane.xlu0 %827
        %v829 = vrot.slane %v828, 4
        %v830 = vadd.f32 %v828, %v829
        %v831 = vrot.slane %v830, 2
        %v832 = vadd.f32 %v830, %v831
        %v833 = vrot.slane %v832, 1
        %v834 = vadd.f32 %v832, %v833
        %s835 = vtos %v834
        %s836 = smul.f32 %s835, %s812
        %s837 = smul.f32 %s824, %s824
        %s838 = smul.f32 %s836, %s836
        %s839 = sadd.f32 %s837, %s838
        %v840 = vstv %s839
        %v841 = vrsqrt.pop %v840
        %v842 = vmul.f32 %v840, %v841
        %vm843 = vcmp.eq.f32.partialorder %v840, inf
        %v844 = vsel %vm843, %v840, %v842
        %vm845 = vcmp.eq.f32.partialorder %v840, 0.0
        %v846 = vand.u32 %v840, 2147483648
        %v847 = vsel %vm845, %v846, %v844
        %s848 = vtos %v847
        %s849 = sadd.f32 %s848, 1.1920929e-07
        %v850 = vstv %s849
        %v851 = vrcp.pop %v850
        %s852 = vtos %v851
        %s853 = smul.f32 %s824, %s852
        %s854 = smul.f32 %s836, %s852
        %v855 = vstv %s853
        %v856 = vmul.f32 %v666, %v855
        %v857 = vstv %s854
        %v858 = vmul.f32 %v668, %v857
        %v859 = vadd.f32 %v856, %v858
        %v860 = vmax.f32 %v859, -0.9999999
        %v861 = vmin.f32 %v860, 0.9999999
        %v862 = vand.u32 2147483647, %v861
        %vm863 = vcmp.gt.f32.partialorder %v862, 0.5
        %v864 = vsub.f32 1.0, %v862
        %v865 = vmul.f32 %v864, 0.5
        %v866 = vmul.f32 %v861, %v861
        %v867 = vsel %vm863, %v865, %v866
        %v868 = vrsqrt.pop %v867
        %v869 = vmul.f32 %v867, %v868
        %vm870 = vcmp.eq.f32.partialorder %v867, inf
        %v871 = vsel %vm870, %v867, %v869
        %vm872 = vcmp.eq.f32.partialorder %v867, 0.0
        %v873 = vand.u32 %v867, 2147483648
        %v874 = vsel %vm872, %v873, %v871
        %v875 = vsel %vm863, %v874, %v861
        %v876 = vmul.f32 %v867, 0.0421632
        %v877 = vadd.f32 %v876, 0.024181312
        %v878 = vmul.f32 %v877, %v867
        %v879 = vadd.f32 %v878, 0.045470025
        %v880 = vmul.f32 %v879, %v867
        %v881 = vadd.f32 %v880, 0.074953005
        %v882 = vmul.f32 %v881, %v867
        %v883 = vadd.f32 %v882, 0.16666752
        %v884 = vmul.f32 %v875, %v867
        %v885 = vmul.f32 %v884, %v883
        %v886 = vadd.f32 %v875, %v885
        %v887 = vsub.f32 1.5707964, %v886
        %vm888 = vcmp.lt.f32.partialorder %v861, 0.0
        %v889 = vmul.f32 %v886, 2.0
        %v890 = vsub.f32 3.1415927, %v889
        %v891 = vsel %vm888, %v890, %v889
        %v892 = vsel %vm863, %v891, %v887
        %p893 = scmp.gt.f32.partialorder %s808, 0.0
        %s894 = scalar_select %p893, 1, 0
        %s895 = scvt.s32.f32 %s894
        %v896 = vmul.f32 %v892, %v892
        %v897 = vmul.f32 %v896, %v798
        %v898 = vsel %vm607, %v897, 0.0
        %899 = vadd.xlane.f32.xlu0 %v898
        %v900 = vpop.xlane.xlu0 %899
        %v901 = vrot.slane %v900, 4
        %v902 = vadd.f32 %v900, %v901
        %v903 = vrot.slane %v902, 2
        %v904 = vadd.f32 %v902, %v903
        %v905 = vrot.slane %v904, 1
        %v906 = vadd.f32 %v904, %v905
        %s907 = vtos %v906
        %s908 = smul.f32 %s895, %s907
        %s909 = sadd.f32 %s781, %s908
        %v910 = vmul.f32 %v892, %v798
        %v911 = vsel %vm607, %v910, 0.0
        %912 = vadd.xlane.f32.xlu0 %v911
        %v913 = vpop.xlane.xlu0 %912
        %v914 = vrot.slane %v913, 4
        %v915 = vadd.f32 %v913, %v914
        %v916 = vrot.slane %v915, 2
        %v917 = vadd.f32 %v915, %v916
        %v918 = vrot.slane %v917, 1
        %v919 = vadd.f32 %v917, %v918
        %s920 = vtos %v919
        %s921 = smul.f32 %s895, %s920
        %s922 = sadd.f32 %s794, %s921
        %s923 = sadd.f32 %s795, %s808
        %s924 = scalar_lea.vmem %s516, 2
        %v925 = vld [vmem:[%s924] sm:$0x1]
        %v926 = vunpack.c.l.bf16 %v925
        %v927 = vsel %vm607, %v926, 0.0
        %928 = vadd.xlane.f32.xlu0 %v927
        %v929 = vpop.xlane.xlu0 %928
        %v930 = vrot.slane %v929, 4
        %v931 = vadd.f32 %v929, %v930
        %v932 = vrot.slane %v931, 2
        %v933 = vadd.f32 %v931, %v932
        %v934 = vrot.slane %v933, 1
        %v935 = vadd.f32 %v933, %v934
        %s936 = vtos %v935
        %s937 = sadd.f32 %s936, 1.1920929e-07
        %v938 = vstv %s937
        %v939 = vrcp.pop %v938
        %s940 = vtos %v939
        %v941 = vmul.f32 %v666, %v926
        %v942 = vsel %vm607, %v941, 0.0
        %943 = vadd.xlane.f32.xlu0 %v942
        %v944 = vpop.xlane.xlu0 %943
        %v945 = vrot.slane %v944, 4
        %v946 = vadd.f32 %v944, %v945
        %v947 = vrot.slane %v946, 2
        %v948 = vadd.f32 %v946, %v947
        %v949 = vrot.slane %v948, 1
        %v950 = vadd.f32 %v948, %v949
        %s951 = vtos %v950
        %s952 = smul.f32 %s951, %s940
        %v953 = vmul.f32 %v668, %v926
        %v954 = vsel %vm607, %v953, 0.0
        %955 = vadd.xlane.f32.xlu0 %v954
        %v956 = vpop.xlane.xlu0 %955
        %v957 = vrot.slane %v956, 4
        %v958 = vadd.f32 %v956, %v957
        %v959 = vrot.slane %v958, 2
        %v960 = vadd.f32 %v958, %v959
        %v961 = vrot.slane %v960, 1
        %v962 = vadd.f32 %v960, %v961
        %s963 = vtos %v962
        %s964 = smul.f32 %s963, %s940
        %s965 = smul.f32 %s952, %s952
        %s966 = smul.f32 %s964, %s964
        %s967 = sadd.f32 %s965, %s966
        %v968 = vstv %s967
        %v969 = vrsqrt.pop %v968
        %v970 = vmul.f32 %v968, %v969
        %vm971 = vcmp.eq.f32.partialorder %v968, inf
        %v972 = vsel %vm971, %v968, %v970
        %vm973 = vcmp.eq.f32.partialorder %v968, 0.0
        %v974 = vand.u32 %v968, 2147483648
        %v975 = vsel %vm973, %v974, %v972
        %s976 = vtos %v975
        %s977 = sadd.f32 %s976, 1.1920929e-07
        %v978 = vstv %s977
        %v979 = vrcp.pop %v978
        %s980 = vtos %v979
        %s981 = smul.f32 %s952, %s980
        %s982 = smul.f32 %s964, %s980
        %v983 = vstv %s981
        %v984 = vmul.f32 %v666, %v983
        %v985 = vstv %s982
        %v986 = vmul.f32 %v668, %v985
        %v987 = vadd.f32 %v984, %v986
        %v988 = vmax.f32 %v987, -0.9999999
        %v989 = vmin.f32 %v988, 0.9999999
        %v990 = vand.u32 2147483647, %v989
        %vm991 = vcmp.gt.f32.partialorder %v990, 0.5
        %v992 = vsub.f32 1.0, %v990
        %v993 = vmul.f32 %v992, 0.5
        %v994 = vmul.f32 %v989, %v989
        %v995 = vsel %vm991, %v993, %v994
        %v996 = vrsqrt.pop %v995
        %v997 = vmul.f32 %v995, %v996
        %vm998 = vcmp.eq.f32.partialorder %v995, inf
        %v999 = vsel %vm998, %v995, %v997
        %vm1000 = vcmp.eq.f32.partialorder %v995, 0.0
        %v1001 = vand.u32 %v995, 2147483648
        %v1002 = vsel %vm1000, %v1001, %v999
        %v1003 = vsel %vm991, %v1002, %v989
        %v1004 = vmul.f32 %v995, 0.0421632
        %v1005 = vadd.f32 %v1004, 0.024181312
        %v1006 = vmul.f32 %v1005, %v995
        %v1007 = vadd.f32 %v1006, 0.045470025
        %v1008 = vmul.f32 %v1007, %v995
        %v1009 = vadd.f32 %v1008, 0.074953005
        %v1010 = vmul.f32 %v1009, %v995
        %v1011 = vadd.f32 %v1010, 0.16666752
        %v1012 = vmul.f32 %v1003, %v995
        %v1013 = vmul.f32 %v1012, %v1011
        %v1014 = vadd.f32 %v1003, %v1013
        %v1015 = vsub.f32 1.5707964, %v1014
        %vm1016 = vcmp.lt.f32.partialorder %v989, 0.0
        %v1017 = vmul.f32 %v1014, 2.0
        %v1018 = vsub.f32 3.1415927, %v1017
        %v1019 = vsel %vm1016, %v1018, %v1017
        %v1020 = vsel %vm991, %v1019, %v1015
        %p1021 = scmp.gt.f32.partialorder %s936, 0.0
        %s1022 = scalar_select %p1021, 1, 0
        %s1023 = scvt.s32.f32 %s1022
        %v1024 = vmul.f32 %v1020, %v1020
        %v1025 = vmul.f32 %v1024, %v926
        %v1026 = vsel %vm607, %v1025, 0.0
        %1027 = vadd.xlane.f32.xlu0 %v1026
        %v1028 = vpop.xlane.xlu0 %1027
        %v1029 = vrot.slane %v1028, 4
        %v1030 = vadd.f32 %v1028, %v1029
        %v1031 = vrot.slane %v1030, 2
        %v1032 = vadd.f32 %v1030, %v1031
        %v1033 = vrot.slane %v1032, 1
        %v1034 = vadd.f32 %v1032, %v1033
        %s1035 = vtos %v1034
        %s1036 = smul.f32 %s1023, %s1035
        %s1037 = sadd.f32 %s909, %s1036
        %v1038 = vmul.f32 %v1020, %v926
        %v1039 = vsel %vm607, %v1038, 0.0
        %1040 = vadd.xlane.f32.xlu0 %v1039
        %v1041 = vpop.xlane.xlu0 %1040
        %v1042 = vrot.slane %v1041, 4
        %v1043 = vadd.f32 %v1041, %v1042
        %v1044 = vrot.slane %v1043, 2
        %v1045 = vadd.f32 %v1043, %v1044
        %v1046 = vrot.slane %v1045, 1
        %v1047 = vadd.f32 %v1045, %v1046
        %s1048 = vtos %v1047
        %s1049 = smul.f32 %s1023, %s1048
        %s1050 = sadd.f32 %s922, %s1049
        %s1051 = sadd.f32 %s923, %s936
        %v1052 = vlaneseq
        %v1053 = vand.u32 %v1052, 127
        %vm1054 = vcmp.eq.s32.totalorder %v1053, 0
        %v1055 = vstv %s617
        %v1056 = vsel %vm1054, %v1055, 0.0
        %vm1057 = vcmp.eq.s32.totalorder %v1053, 1
        %v1058 = vstv %s629
        %v1059 = vsel %vm1057, %v1058, %v1056
        %vm1060 = vcmp.eq.s32.totalorder %v1053, 2
        %v1061 = vstv %s641
        %v1062 = vsel %vm1060, %v1061, %v1059
        %vm1063 = vcmp.eq.s32.totalorder %v1053, 3
        %v1064 = vstv %s652
        %v1065 = vsel %vm1063, %v1064, %v1062
        %vm1066 = vcmp.eq.s32.totalorder %v1053, 4
        %v1067 = vstv %s664
        %v1068 = vsel %vm1066, %v1067, %v1065
        %vm1069 = vcmp.eq.s32.totalorder %v1053, 5
        %v1070 = vstv %s1037
        %v1071 = vsel %vm1069, %v1070, %v1068
        %vm1072 = vcmp.eq.s32.totalorder %v1053, 6
        %v1073 = vstv %s1050
        %v1074 = vsel %vm1072, %v1073, %v1071
        %vm1075 = vcmp.eq.s32.totalorder %v1053, 7
        %v1076 = vstv %s1051
        %v1077 = vsel %vm1075, %v1076, %v1074
        %1078 = vst [vmem:[%s519] sm:$0x1] %v1077
        %p1079 = scmp.lt.s32.totalorder %s23, 1
        %s1080 = scalar_select %p1079, %s23, 1
        %s1081 = scalar_lea.vmem %s11, %s1080
        // Predicated region
        $region69: #{transformer_loss.1} parent=63 // pred_check
          %p1082 = pneg %p322
        $region70: #{transformer_loss.1} parent=63 // pred_check_branch
          %1084 = sbr.rel (%p1082) target = $region72
        $region71: #{transformer_loss.1} parent=63 // pred_region
          _
        $region72: #{transformer_loss.1} parent=63 // pred_fallthru
          _
      $region64: #{transformer_loss.1} parent=5 // pred_fallthru
        _
      %p1085 = scmp.le.s32.totalorder 2, %s18
      // Predicated region
      $region73: #{transformer_loss.1} parent=5 // pred_check
        %p1086 = pneg %p1085
      $region74: #{transformer_loss.1} parent=5 // pred_check_branch
        %1088 = sbr.rel (%p1086) target = $region76
      $region75: #{transformer_loss.1} parent=5 // pred_region
        %s1089 = ssub.s32 %s18, 2
        // Predicated region
        $region77: #{transformer_loss.1} parent=75 // pred_check
          %p1090 = pneg %p328
        $region78: #{transformer_loss.1} parent=75 // pred_check_branch
          %1092 = sbr.rel (%p1090) target = $region80
        $region79: #{transformer_loss.1} parent=75 // pred_region
          %p1093 = scmp.lt.s32.totalorder %s24, 1
          %s1094 = scalar_select %p1093, %s24, 1
          %s1095 = scalar_lea.vmem %s11, %s1094
        $region80: #{transformer_loss.1} parent=75 // pred_fallthru
          _
      $region76: #{transformer_loss.1} parent=5 // pred_fallthru
        _
    $region6: #{transformer_loss.1} parent=1 // loop_footer
      %s22 = sadd.s32 1, %s18
    $region7: #{transformer_loss.1} parent=1 // loop_footer_branch
      %17 = sbr.rel target = $region3
    $region8: #{transformer_loss.1} parent=1 // loop_exit
      _
    %1096 = vsyncpa [#allocation3], 1
    %s1097 = scalar_lea.sflag [#allocation3], 1
    %1098 = vsyncpa %s1097, 1

</llo_original>
